<compile_context>
chip_gen: v5e
topology: v5e:2x2
jax: 0.10.0
libtpu: 0.0.40
codegen_flags: <defaults>
</compile_context>

<pallas_src>
import functools
import math

import jax
import jax.numpy as jnp
from jax import lax
from jax.experimental import pallas as pl
from jax.experimental.pallas import tpu as pltpu


def _round_up(x, m):
    return (x + m - 1) // m * m


# ------------------------------ fused kernel ---------------------------------

def _stack_kernel(*refs, nblock, wrow0, wrow1, pool, ho, wo, wq):
    """Whole CnnDownStack forward for one image, entirely in VMEM.

    refs (pool=True):  x, w_first, b_first, w_blocks, b_blocks, mask0, mask1,
                       esel, out, patch_scratch, act_scratch
    refs (pool=False): x, w_first, b_first, w_blocks, b_blocks, mask0, mask1,
                       out, patch_scratch

    Shapes: x (1, Cin_p, S0) f32; w_first (Cout_p, 9*Cin_p) bf16;
            b_first (Cout_p, 1) f32; w_blocks (2*nblock, Cout_p, 9*Cout_p) bf16;
            b_blocks (2*nblock, Cout_p, 1) f32; mask0 (1, S0); mask1 (1, S1);
            esel (2*Wo, Wq) f32 0/1; out (1, Cout_p, S1) f32;
            patch_scratch (9*Cmax, S0) bf16; act_scratch (Cout_p, S1) f32.
    Activations are (C, S): flattened padded spatial grid on lanes, 1-pixel
    halo kept at exactly 0 (== the conv's zero padding).
    """
    if pool:
        (x_ref, wf_ref, bf_ref, wb_ref, bb_ref, m0_ref, m1_ref, esel_ref,
         o_ref, patch_ref, act_ref) = refs
    else:
        (x_ref, wf_ref, bf_ref, wb_ref, bb_ref, m0_ref, m1_ref,
         o_ref, patch_ref) = refs
        esel_ref = act_ref = None

    def shift(v, off):
        # shifted[:, p] = v[:, p + off].  Wraparound can only reach halo/tail
        # positions, which are always masked / never selected afterwards.
        n = v.shape[-1]
        return v if off == 0 else pltpu.roll(v, shift=(-off) % n, axis=1)

    def conv3x3(x, w, b, wrow):
        # Single im2col MXU matmul (K = 9*Cin) with bf16 operands and f32
        # accumulation.  The 9 lane-rolled taps are stored straight into the
        # persistent bf16 patch scratch at 16-aligned sublane offsets (no
        # concatenate copy).  Rolls stay f32 for portability; the bf16 cast
        # happens at the store.  Output is only valid at interior positions;
        # halo/tail garbage is masked by the caller.
        ck, s = x.shape
        t = 0
        for dy in (-1, 0, 1):
            for dx in (-1, 0, 1):
                tap = shift(x, dy * wrow + dx)
                patch_ref[t * ck:(t + 1) * ck, :s] = tap.astype(jnp.bfloat16)
                t += 1
        acc = jnp.dot(w, patch_ref[:9 * ck, :s],
                      preferred_element_type=jnp.float32)
        return acc + b

    # -- firstconv -------------------------------------------------------------
    y = conv3x3(x_ref[0], wf_ref[...], bf_ref[...], wrow0)      # (Cout_p, S0)
    m0 = m0_ref[...]                                             # (1, S0)

    if pool:
        # -- max_pool2d(kernel=3, stride=2, padding=1) -------------------------
        # Dense 3x3 window max (top-left anchored) via 4 lane rolls + maxes,
        # then a cheap strided subsample: one tiny per-output-row matmul with
        # the (2*Wo, Wq) 0/1 even-column selector, written straight into the
        # zeroed pooled-activation scratch (replaces the old (S0,S1) matmul).
        yb = jnp.where(m0 > 0.0, y, -1e30)   # finite "-inf" (0*x must stay 0)
        r = jnp.maximum(yb, shift(yb, 1))
        r = jnp.maximum(r, shift(yb, 2))                  # 1x3 window max
        c = jnp.maximum(r, shift(r, wrow0))
        c = jnp.maximum(c, shift(r, 2 * wrow0))           # 3x3 max at top-left
        act_ref[...] = jnp.zeros(act_ref.shape, act_ref.dtype)
        esel = esel_ref[...]                              # (2*Wo, Wq) 0/1 f32
        for i in range(ho):
            src = 2 * i * wrow0
            sub = jnp.dot(c[:, src:src + 2 * wo], esel,
                          preferred_element_type=jnp.float32)   # (Cout_p, Wq)
            act_ref[:, (i + 1) * wq:(i + 2) * wq] = sub
        a = act_ref[...]                                  # zero halo everywhere
    else:
        a = y * m0                                        # zero halo for blocks

    # -- residual blocks:  a <- a + conv1(relu(conv0(relu(a)))) ----------------
    # TODO(synk): for nblock > 2 switch to lax.fori_loop over wb_ref/bb_ref to
    #             bound live ranges; nblock<=2 is kept unrolled per the review.
    m1 = m1_ref[...]                                             # (1, S1)
    for nb in range(nblock):
        y0 = conv3x3(jnp.maximum(a, 0.0), wb_ref[2 * nb], bb_ref[2 * nb],
                     wrow1)
        h1 = jnp.maximum(y0, 0.0) * m1                    # relu + re-zero halo
        y1 = conv3x3(h1, wb_ref[2 * nb + 1], bb_ref[2 * nb + 1], wrow1)
        a = a + y1 * m1                                   # residual, halo stays 0

    o_ref[0] = a.astype(o_ref.dtype)


# --------------------------- packing (run once) --------------------------------

def _pack_conv3x3(w_hwio, b, cin_p, cout_p):
    """(3,3,cin,cout) HWIO + (cout,) bias -> (cout_p, 9*cin_p) bf16, (cout_p,1) f32."""
    kh, kw, cin, cout = w_hwio.shape
    w = jnp.pad(w_hwio, ((0, 0), (0, 0), (0, cin_p - cin), (0, cout_p - cout)))
    w = jnp.transpose(w, (3, 0, 1, 2)).reshape(cout_p, kh * kw * cin_p)
    bp = jnp.pad(b, (0, cout_p - cout)).reshape(cout_p, 1)
    return w.astype(jnp.bfloat16), bp.astype(jnp.float32)


def _interior_mask(h, w, s):
    m = jnp.zeros((h + 2, w + 2), jnp.float32).at[1:h + 1, 1:w + 1].set(1.0)
    m = m.reshape(1, (h + 2) * (w + 2))
    return jnp.pad(m, ((0, 0), (0, s - m.shape[1])))


def prepare_cnn_down_stack(params, inchan, H, W, pool=True):
    """One-time packing of weights / masks / pool selector, hoisted out of the
    per-call path (per perf review)."""
    fw, fb = params["firstconv"]
    cout = fw.shape[-1]
    nblock = len(params["blocks"])

    cin_p = _round_up(inchan, 16)     # 16-aligned -> bf16 patch tiles aligned
    cout_p = _round_up(cout, 16)
    Hp, Wp = H + 2, W + 2
    S0 = _round_up(Hp * Wp, 128)
    if pool:
        Ho, Wo = (H + 1) // 2, (W + 1) // 2
    else:
        Ho, Wo = H, W
    Hq, Wq = Ho + 2, Wo + 2
    S1 = _round_up(Hq * Wq, 128)

    wf, bf = _pack_conv3x3(fw, fb, cin_p, cout_p)
    wbs, bbs = [], []
    for (w0, b0, w1, b1) in params["blocks"]:
        for w_, b_ in ((w0, b0), (w1, b1)):
            wr, br = _pack_conv3x3(w_, b_, cout_p, cout_p)
            wbs.append(wr)
            bbs.append(br)
    wbs = jnp.stack(wbs)              # (2*nblock, cout_p, 9*cout_p) bf16
    bbs = jnp.stack(bbs)              # (2*nblock, cout_p, 1) f32

    mask0 = _interior_mask(H, W, S0)
    mask1 = _interior_mask(Ho, Wo, S1) if pool else mask0
    if pool:
        jj = jnp.arange(Wo)
        esel = jnp.zeros((2 * Wo, Wq), jnp.float32).at[2 * jj, jj + 1].set(1.0)
    else:
        esel = None

    return dict(pool=pool, nblock=nblock, inchan=inchan, cout=cout,
                cin_p=cin_p, cout_p=cout_p, H=H, W=W, Hp=Hp, Wp=Wp, S0=S0,
                Ho=Ho, Wo=Wo, Hq=Hq, Wq=Wq, S1=S1,
                wf=wf, bf=bf, wb=wbs, bb=bbs,
                mask0=mask0, mask1=mask1, esel=esel)


# ------------------------------ forward wrapper --------------------------------

def cnn_down_stack_forward(x_nchw, prep):
    """Forward pass of CnnDownStack.  Input/output are NCHW (PyTorch layout)."""
    p = prep
    B, cin, H, W = x_nchw.shape
    assert (cin, H, W) == (p["inchan"], p["H"], p["W"])
    pool, nblock = p["pool"], p["nblock"]
    cin_p, cout_p, cout = p["cin_p"], p["cout_p"], p["cout"]
    Hp, Wp, S0 = p["Hp"], p["Wp"], p["S0"]
    Ho, Wo, Hq, Wq, S1 = p["Ho"], p["Wo"], p["Hq"], p["Wq"], p["S1"]

    # Pad once at stack entry (halo + channel pad + lane-tail pad); everything
    # downstream stays in VMEM inside the single fused kernel.
    xp = jnp.pad(x_nchw, ((0, 0), (0, cin_p - cin), (1, 1), (1, 1)))
    x_flat = jnp.pad(xp.reshape(B, cin_p, Hp * Wp),
                     ((0, 0), (0, 0), (0, S0 - Hp * Wp)))

    args = [x_flat, p["wf"], p["bf"], p["wb"], p["bb"], p["mask0"], p["mask1"]]
    in_specs = [
        pl.BlockSpec((1, cin_p, S0), lambda b: (b, 0, 0)),
        pl.BlockSpec(p["wf"].shape, lambda b: (0, 0)),
        pl.BlockSpec(p["bf"].shape, lambda b: (0, 0)),
        pl.BlockSpec(p["wb"].shape, lambda b: (0, 0, 0)),
        pl.BlockSpec(p["bb"].shape, lambda b: (0, 0, 0)),
        pl.BlockSpec(p["mask0"].shape, lambda b: (0, 0)),
        pl.BlockSpec(p["mask1"].shape, lambda b: (0, 0)),
    ]
    if pool:
        args.append(p["esel"])
        in_specs.append(pl.BlockSpec(p["esel"].shape, lambda b: (0, 0)))

    cmax = max(cin_p, cout_p)
    scratch = [pltpu.VMEM((9 * cmax, S0), jnp.bfloat16)]     # im2col patches
    if pool:
        scratch.append(pltpu.VMEM((cout_p, S1), jnp.float32))  # pooled act

    kernel = functools.partial(
        _stack_kernel, nblock=nblock, wrow0=Wp,
        wrow1=Wq if pool else Wp, pool=pool, ho=Ho, wo=Wo, wq=Wq)

    def nbytes(a):
        return a.size * a.dtype.itemsize

    conv_flops = (2 * 9 * cin_p * cout_p * S0
                  + nblock * 2 * (2 * 9 * cout_p * cout_p * S1))
    pool_flops = (Ho * 2 * cout_p * 2 * Wo * Wq + 6 * cout_p * S0) if pool else 0
    out_bytes = B * cout_p * S1 * 4
    cost = pl.CostEstimate(flops=int(B * (conv_flops + pool_flops)),
                           transcendentals=0,
                           bytes_accessed=int(sum(nbytes(a) for a in args)
                                              + out_bytes))

    # Explicit VMEM budget (per review): double-buffered x/out blocks +
    # constants + scratches + headroom for live activation values; clamped so
    # it also fits v7x's 64 MiB per-TC VMEM.
    vmem_need = (2 * (cin_p * S0 * 4 + cout_p * S1 * 4)
                 + 2 * sum(nbytes(a) for a in args[1:])
                 + 9 * cmax * S0 * 2 + cout_p * S1 * 4
                 + 8 * cout_p * S0 * 4)
    vmem_limit = int(min(48 * 1024 * 1024,
                         max(16 * 1024 * 1024, 2 * vmem_need)))

    out_flat = pl.pallas_call(
        kernel,
        out_shape=jax.ShapeDtypeStruct((B, cout_p, S1), jnp.float32),
        grid=(B,),
        in_specs=in_specs,
        out_specs=pl.BlockSpec((1, cout_p, S1), lambda b: (b, 0, 0)),
        scratch_shapes=scratch,
        compiler_params=pltpu.CompilerParams(
            dimension_semantics=("parallel",),   # B>=2 feeds both v7x TCs
            vmem_limit_bytes=vmem_limit),
        cost_estimate=cost,
    )(*args)

    # Strip channel pad, lane-tail padding and the 1-pixel halo (tiny, final
    # output-only layout plumbing); result is NCHW with no transposes anywhere.
    out = out_flat[:, :cout, :Hq * Wq].reshape(B, cout, Hq, Wq)
    return out[:, :, 1:-1, 1:-1]


# ----------------------- parameters (deterministic) ---------------------------

def init_normed_conv(key, cin, cout, scale):
    """NormedConv2d init: per-output-channel L2-normalized weight, zero bias."""
    w = jax.random.normal(key, (3, 3, cin, cout), jnp.float32)
    norm = jnp.sqrt(jnp.sum(w * w, axis=(0, 1, 2), keepdims=True))
    w = w * (scale / norm)
    b = jnp.zeros((cout,), jnp.float32)
    return w, b


def init_cnn_down_stack(key, inchan, nblock, outchan, scale=1.0):
    keys = jax.random.split(key, 1 + 2 * nblock)
    fw, fb = init_normed_conv(keys[0], inchan, outchan, 1.0)
    s = scale / math.sqrt(nblock)
    block_scale = math.sqrt(s)
    blocks = []
    for n in range(nblock):
        w0, b0 = init_normed_conv(keys[1 + 2 * n], outchan, outchan, block_scale)
        w1, b1 = init_normed_conv(keys[2 + 2 * n], outchan, outchan, block_scale)
        blocks.append((w0, b0, w1, b1))
    return {"firstconv": (fw, fb), "blocks": blocks}


# ---------------------------- pure-JAX reference ------------------------------

def _ref_conv3x3(x_nhwc, w, b):
    y = lax.conv_general_dilated(
        x_nhwc, w, window_strides=(1, 1), padding="SAME",
        dimension_numbers=("NHWC", "HWIO", "NHWC"))
    return y + b


def ref_forward(x_nchw, params, pool=True):
    x = jnp.transpose(x_nchw, (0, 2, 3, 1))
    fw, fb = params["firstconv"]
    x = _ref_conv3x3(x, fw, fb)
    if pool:
        x = lax.reduce_window(
            x, -jnp.inf, lax.max,
            window_dimensions=(1, 3, 3, 1), window_strides=(1, 2, 2, 1),
            padding=((0, 0), (1, 1), (1, 1), (0, 0)))
    for (w0, b0, w1, b1) in params["blocks"]:
        h = _ref_conv3x3(jnp.maximum(x, 0.0), w0, b0)
        x = x + _ref_conv3x3(jnp.maximum(h, 0.0), w1, b1)
    return jnp.transpose(x, (0, 3, 1, 2))


# ----------------------------------- main --------------------------------------

if __name__ == "__main__":
    B, INCHAN, H, W = 2, 4, 16, 16
    NBLOCK, OUTCHAN = 2, 16

    key = jax.random.PRNGKey(0)
    k_x, k_p = jax.random.split(key)
    x = jax.random.normal(k_x, (B, INCHAN, H, W), jnp.float32)   # NCHW input
    params = init_cnn_down_stack(k_p, INCHAN, NBLOCK, OUTCHAN, scale=1.0)

    prep = prepare_cnn_down_stack(params, INCHAN, H, W, pool=True)
    out = jax.block_until_ready(cnn_down_stack_forward(x, prep))

    expected_shape = (B, OUTCHAN, (H + 1) // 2, (W + 1) // 2)
    assert out.shape == expected_shape, (out.shape, expected_shape)

    ref = jax.block_until_ready(ref_forward(x, params, pool=True))
    err = float(jnp.max(jnp.abs(out - ref)))
    # Conv matmuls use bf16 operands on the MXU (per perf review), f32
    # accumulation; tolerance reflects bf16 operand rounding vs f32 reference.
    assert jnp.allclose(out, ref, atol=2e-2, rtol=2e-2), err

    print("KERNEL_OK")
</pallas_src>

<mosaic_0001>
module attributes {stable_mosaic.version = 11 : i64} {
  func.func @_stack_kernel(%arg0: i32, %arg1: memref<1x16x384xf32, #tpu.memory_space<vmem>>, %arg2: memref<16x144xbf16, #tpu.memory_space<vmem>>, %arg3: memref<16x1xf32, #tpu.memory_space<vmem>>, %arg4: memref<4x16x144xbf16, #tpu.memory_space<vmem>>, %arg5: memref<4x16x1xf32, #tpu.memory_space<vmem>>, %arg6: memref<1x384xf32, #tpu.memory_space<vmem>>, %arg7: memref<1x128xf32, #tpu.memory_space<vmem>>, %arg8: memref<16x10xf32, #tpu.memory_space<vmem>>, %arg9: memref<1x16x128xf32, #tpu.memory_space<vmem>>, %arg10: memref<144x384xbf16, #tpu.memory_space<vmem>>, %arg11: memref<16x128xf32, #tpu.memory_space<vmem>>) attributes {dimension_semantics = [#tpu.dimension_semantics<parallel>], iteration_bounds = array<i64: 2>, scalar_prefetch = 0 : i64, scratch_operands = 2 : i64, tpu.core_type = #tpu.core_type<tc>, window_params = [{transform_indices = @transform_0, window_bounds = array<i64: 1, 16, 384>}, {pipeline_mode = #tpu.pipeline_mode<synchronous>, transform_indices = @transform_1, window_bounds = array<i64: 16, 144>}, {pipeline_mode = #tpu.pipeline_mode<synchronous>, transform_indices = @transform_2, window_bounds = array<i64: 16, 1>}, {pipeline_mode = #tpu.pipeline_mode<synchronous>, transform_indices = @transform_3, window_bounds = array<i64: 4, 16, 144>}, {pipeline_mode = #tpu.pipeline_mode<synchronous>, transform_indices = @transform_4, window_bounds = array<i64: 4, 16, 1>}, {pipeline_mode = #tpu.pipeline_mode<synchronous>, transform_indices = @transform_5, window_bounds = array<i64: 1, 384>}, {pipeline_mode = #tpu.pipeline_mode<synchronous>, transform_indices = @transform_6, window_bounds = array<i64: 1, 128>}, {pipeline_mode = #tpu.pipeline_mode<synchronous>, transform_indices = @transform_7, window_bounds = array<i64: 16, 10>}, {transform_indices = @transform_8, window_bounds = array<i64: 1, 16, 128>}]} {
    %c0 = arith.constant 0 : index
    %c0_0 = arith.constant 0 : index
    %c0_1 = arith.constant 0 : index
    %0 = vector.load %arg1[%c0, %c0_0, %c0_1] : memref<1x16x384xf32, #tpu.memory_space<vmem>>, vector<1x16x384xf32>
    %1 = vector.shape_cast %0 : vector<1x16x384xf32> to vector<16x384xf32>
    %c0_2 = arith.constant 0 : index
    %c0_3 = arith.constant 0 : index
    %2 = vector.load %arg2[%c0_2, %c0_3] : memref<16x144xbf16, #tpu.memory_space<vmem>>, vector<16x144xbf16>
    %c0_4 = arith.constant 0 : index
    %c0_5 = arith.constant 0 : index
    %3 = vector.load %arg3[%c0_4, %c0_5] : memref<16x1xf32, #tpu.memory_space<vmem>>, vector<16x1xf32>
    %c19_i32 = arith.constant 19 : i32
    %4 = tpu.dynamic_rotate %1 by %c19_i32 dim 1 : vector<16x384xf32>, i32 -> vector<16x384xf32>
    %5 = arith.truncf %4 : vector<16x384xf32> to vector<16x384xbf16>
    %c0_6 = arith.constant 0 : index
    %c0_7 = arith.constant 0 : index
    %6 = vector.load %arg10[%c0_6, %c0_7] : memref<144x384xbf16, #tpu.memory_space<vmem>>, vector<16x384xbf16>
    tpu.vector_store %arg10[%c0_6, %c0_7], %5 {strides = array<i32>} : memref<144x384xbf16, #tpu.memory_space<vmem>>, vector<16x384xbf16>,
    %c18_i32 = arith.constant 18 : i32
    %7 = tpu.dynamic_rotate %1 by %c18_i32 dim 1 : vector<16x384xf32>, i32 -> vector<16x384xf32>
    %8 = arith.truncf %7 : vector<16x384xf32> to vector<16x384xbf16>
    %c16 = arith.constant 16 : index
    %c0_8 = arith.constant 0 : index
    %9 = vector.load %arg10[%c16, %c0_8] : memref<144x384xbf16, #tpu.memory_space<vmem>>, vector<16x384xbf16>
    tpu.vector_store %arg10[%c16, %c0_8], %8 {strides = array<i32>} : memref<144x384xbf16, #tpu.memory_space<vmem>>, vector<16x384xbf16>,
    %c17_i32 = arith.constant 17 : i32
    %10 = tpu.dynamic_rotate %1 by %c17_i32 dim 1 : vector<16x384xf32>, i32 -> vector<16x384xf32>
    %11 = arith.truncf %10 : vector<16x384xf32> to vector<16x384xbf16>
    %c32 = arith.constant 32 : index
    %c0_9 = arith.constant 0 : index
    %12 = vector.load %arg10[%c32, %c0_9] : memref<144x384xbf16, #tpu.memory_space<vmem>>, vector<16x384xbf16>
    tpu.vector_store %arg10[%c32, %c0_9], %11 {strides = array<i32>} : memref<144x384xbf16, #tpu.memory_space<vmem>>, vector<16x384xbf16>,
    %c1_i32 = arith.constant 1 : i32
    %13 = tpu.dynamic_rotate %1 by %c1_i32 dim 1 : vector<16x384xf32>, i32 -> vector<16x384xf32>
    %14 = arith.truncf %13 : vector<16x384xf32> to vector<16x384xbf16>
    %c48 = arith.constant 48 : index
    %c0_10 = arith.constant 0 : index
    %15 = vector.load %arg10[%c48, %c0_10] : memref<144x384xbf16, #tpu.memory_space<vmem>>, vector<16x384xbf16>
    tpu.vector_store %arg10[%c48, %c0_10], %14 {strides = array<i32>} : memref<144x384xbf16, #tpu.memory_space<vmem>>, vector<16x384xbf16>,
    %16 = arith.truncf %1 : vector<16x384xf32> to vector<16x384xbf16>
    %c64 = arith.constant 64 : index
    %c0_11 = arith.constant 0 : index
    %17 = vector.load %arg10[%c64, %c0_11] : memref<144x384xbf16, #tpu.memory_space<vmem>>, vector<16x384xbf16>
    tpu.vector_store %arg10[%c64, %c0_11], %16 {strides = array<i32>} : memref<144x384xbf16, #tpu.memory_space<vmem>>, vector<16x384xbf16>,
    %c383_i32 = arith.constant 383 : i32
    %18 = tpu.dynamic_rotate %1 by %c383_i32 dim 1 : vector<16x384xf32>, i32 -> vector<16x384xf32>
    %19 = arith.truncf %18 : vector<16x384xf32> to vector<16x384xbf16>
    %c80 = arith.constant 80 : index
    %c0_12 = arith.constant 0 : index
    %20 = vector.load %arg10[%c80, %c0_12] : memref<144x384xbf16, #tpu.memory_space<vmem>>, vector<16x384xbf16>
    tpu.vector_store %arg10[%c80, %c0_12], %19 {strides = array<i32>} : memref<144x384xbf16, #tpu.memory_space<vmem>>, vector<16x384xbf16>,
    %c367_i32 = arith.constant 367 : i32
    %21 = tpu.dynamic_rotate %1 by %c367_i32 dim 1 : vector<16x384xf32>, i32 -> vector<16x384xf32>
    %22 = arith.truncf %21 : vector<16x384xf32> to vector<16x384xbf16>
    %c96 = arith.constant 96 : index
    %c0_13 = arith.constant 0 : index
    %23 = vector.load %arg10[%c96, %c0_13] : memref<144x384xbf16, #tpu.memory_space<vmem>>, vector<16x384xbf16>
    tpu.vector_store %arg10[%c96, %c0_13], %22 {strides = array<i32>} : memref<144x384xbf16, #tpu.memory_space<vmem>>, vector<16x384xbf16>,
    %c366_i32 = arith.constant 366 : i32
    %24 = tpu.dynamic_rotate %1 by %c366_i32 dim 1 : vector<16x384xf32>, i32 -> vector<16x384xf32>
    %25 = arith.truncf %24 : vector<16x384xf32> to vector<16x384xbf16>
    %c112 = arith.constant 112 : index
    %c0_14 = arith.constant 0 : index
    %26 = vector.load %arg10[%c112, %c0_14] : memref<144x384xbf16, #tpu.memory_space<vmem>>, vector<16x384xbf16>
    tpu.vector_store %arg10[%c112, %c0_14], %25 {strides = array<i32>} : memref<144x384xbf16, #tpu.memory_space<vmem>>, vector<16x384xbf16>,
    %c365_i32 = arith.constant 365 : i32
    %27 = tpu.dynamic_rotate %1 by %c365_i32 dim 1 : vector<16x384xf32>, i32 -> vector<16x384xf32>
    %28 = arith.truncf %27 : vector<16x384xf32> to vector<16x384xbf16>
    %c128 = arith.constant 128 : index
    %c0_15 = arith.constant 0 : index
    %29 = vector.load %arg10[%c128, %c0_15] : memref<144x384xbf16, #tpu.memory_space<vmem>>, vector<16x384xbf16>
    tpu.vector_store %arg10[%c128, %c0_15], %28 {strides = array<i32>} : memref<144x384xbf16, #tpu.memory_space<vmem>>, vector<16x384xbf16>,
    %c0_16 = arith.constant 0 : index
    %c0_17 = arith.constant 0 : index
    %30 = vector.load %arg10[%c0_16, %c0_17] : memref<144x384xbf16, #tpu.memory_space<vmem>>, vector<144x384xbf16>
    %cst = arith.constant dense<0.000000e+00> : vector<16x384xf32>
    %31 = tpu.matmul %2, %30, %cst {dimension_numbers = #tpu.dot_dimension_numbers<[1], [0], [0], [1], [0, 0, 1, 1], [], []>} : vector<16x144xbf16>, vector<144x384xbf16>, vector<16x384xf32> -> vector<16x384xf32>
    %32 = vector.broadcast %3 : vector<16x1xf32> to vector<16x384xf32>
    %33 = arith.addf %31, %32 : vector<16x384xf32>
    %c0_18 = arith.constant 0 : index
    %c0_19 = arith.constant 0 : index
    %34 = vector.load %arg6[%c0_18, %c0_19] : memref<1x384xf32, #tpu.memory_space<vmem>>, vector<1x384xf32>
    %cst_20 = arith.constant 0.000000e+00 : f32
    %35 = vector.broadcast %cst_20 : f32 to vector<1x384xf32>
    %36 = arith.cmpf ogt, %34, %35 : vector<1x384xf32>
    %cst_21 = arith.constant -1.000000e+30 : f32
    %37 = vector.shape_cast %36 : vector<1x384xi1> to vector<1x384xi1>
    %38 = vector.broadcast %37 : vector<1x384xi1> to vector<16x384xi1>
    %39 = vector.broadcast %cst_21 : f32 to vector<16x384xf32>
    %40 = arith.select %38, %33, %39 : vector<16x384xi1>, vector<16x384xf32>
    %c383_i32_22 = arith.constant 383 : i32
    %41 = tpu.dynamic_rotate %40 by %c383_i32_22 dim 1 : vector<16x384xf32>, i32 -> vector<16x384xf32>
    %42 = arith.maximumf %40, %41 : vector<16x384xf32>
    %c382_i32 = arith.constant 382 : i32
    %43 = tpu.dynamic_rotate %40 by %c382_i32 dim 1 : vector<16x384xf32>, i32 -> vector<16x384xf32>
    %44 = arith.maximumf %42, %43 : vector<16x384xf32>
    %c366_i32_23 = arith.constant 366 : i32
    %45 = tpu.dynamic_rotate %44 by %c366_i32_23 dim 1 : vector<16x384xf32>, i32 -> vector<16x384xf32>
    %46 = arith.maximumf %44, %45 : vector<16x384xf32>
    %c348_i32 = arith.constant 348 : i32
    %47 = tpu.dynamic_rotate %44 by %c348_i32 dim 1 : vector<16x384xf32>, i32 -> vector<16x384xf32>
    %48 = arith.maximumf %46, %47 : vector<16x384xf32>
    %cst_24 = arith.constant 0.000000e+00 : f32
    %49 = vector.broadcast %cst_24 : f32 to vector<16x128xf32>
    %c0_25 = arith.constant 0 : index
    %c0_26 = arith.constant 0 : index
    %50 = vector.load %arg11[%c0_25, %c0_26] : memref<16x128xf32, #tpu.memory_space<vmem>>, vector<16x128xf32>
    tpu.vector_store %arg11[%c0_25, %c0_26], %49 {strides = array<i32>} : memref<16x128xf32, #tpu.memory_space<vmem>>, vector<16x128xf32>,
    %c0_27 = arith.constant 0 : index
    %c0_28 = arith.constant 0 : index
    %51 = vector.load %arg8[%c0_27, %c0_28] : memref<16x10xf32, #tpu.memory_space<vmem>>, vector<16x10xf32>
    %52 = vector.extract_strided_slice %48 {offsets = [0, 0], sizes = [16, 16], strides = [1, 1]} : vector<16x384xf32> to vector<16x16xf32>
    %cst_29 = arith.constant dense<0.000000e+00> : vector<16x10xf32>
    %53 = tpu.matmul %52, %51, %cst_29 {dimension_numbers = #tpu.dot_dimension_numbers<[1], [0], [0], [1], [0, 0, 1, 1], [], []>} : vector<16x16xf32>, vector<16x10xf32>, vector<16x10xf32> -> vector<16x10xf32>
    %c0_30 = arith.constant 0 : index
    %c10 = arith.constant 10 : index
    %54 = vector.load %arg11[%c0_30, %c10] : memref<16x128xf32, #tpu.memory_space<vmem>>, vector<16x10xf32>
    tpu.vector_store %arg11[%c0_30, %c10], %53 {strides = array<i32>} : memref<16x128xf32, #tpu.memory_space<vmem>>, vector<16x10xf32>,
    %55 = vector.extract_strided_slice %48 {offsets = [0, 36], sizes = [16, 16], strides = [1, 1]} : vector<16x384xf32> to vector<16x16xf32>
    %cst_31 = arith.constant dense<0.000000e+00> : vector<16x10xf32>
    %56 = tpu.matmul %55, %51, %cst_31 {dimension_numbers = #tpu.dot_dimension_numbers<[1], [0], [0], [1], [0, 0, 1, 1], [], []>} : vector<16x16xf32>, vector<16x10xf32>, vector<16x10xf32> -> vector<16x10xf32>
    %c0_32 = arith.constant 0 : index
    %c20 = arith.constant 20 : index
    %57 = vector.load %arg11[%c0_32, %c20] : memref<16x128xf32, #tpu.memory_space<vmem>>, vector<16x10xf32>
    tpu.vector_store %arg11[%c0_32, %c20], %56 {strides = array<i32>} : memref<16x128xf32, #tpu.memory_space<vmem>>, vector<16x10xf32>,
    %58 = vector.extract_strided_slice %48 {offsets = [0, 72], sizes = [16, 16], strides = [1, 1]} : vector<16x384xf32> to vector<16x16xf32>
    %cst_33 = arith.constant dense<0.000000e+00> : vector<16x10xf32>
    %59 = tpu.matmul %58, %51, %cst_33 {dimension_numbers = #tpu.dot_dimension_numbers<[1], [0], [0], [1], [0, 0, 1, 1], [], []>} : vector<16x16xf32>, vector<16x10xf32>, vector<16x10xf32> -> vector<16x10xf32>
    %c0_34 = arith.constant 0 : index
    %c30 = arith.constant 30 : index
    %60 = vector.load %arg11[%c0_34, %c30] : memref<16x128xf32, #tpu.memory_space<vmem>>, vector<16x10xf32>
    tpu.vector_store %arg11[%c0_34, %c30], %59 {strides = array<i32>} : memref<16x128xf32, #tpu.memory_space<vmem>>, vector<16x10xf32>,
    %61 = vector.extract_strided_slice %48 {offsets = [0, 108], sizes = [16, 16], strides = [1, 1]} : vector<16x384xf32> to vector<16x16xf32>
    %cst_35 = arith.constant dense<0.000000e+00> : vector<16x10xf32>
    %62 = tpu.matmul %61, %51, %cst_35 {dimension_numbers = #tpu.dot_dimension_numbers<[1], [0], [0], [1], [0, 0, 1, 1], [], []>} : vector<16x16xf32>, vector<16x10xf32>, vector<16x10xf32> -> vector<16x10xf32>
    %c0_36 = arith.constant 0 : index
    %c40 = arith.constant 40 : index
    %63 = vector.load %arg11[%c0_36, %c40] : memref<16x128xf32, #tpu.memory_space<vmem>>, vector<16x10xf32>
    tpu.vector_store %arg11[%c0_36, %c40], %62 {strides = array<i32>} : memref<16x128xf32, #tpu.memory_space<vmem>>, vector<16x10xf32>,
    %64 = vector.extract_strided_slice %48 {offsets = [0, 144], sizes = [16, 16], strides = [1, 1]} : vector<16x384xf32> to vector<16x16xf32>
    %cst_37 = arith.constant dense<0.000000e+00> : vector<16x10xf32>
    %65 = tpu.matmul %64, %51, %cst_37 {dimension_numbers = #tpu.dot_dimension_numbers<[1], [0], [0], [1], [0, 0, 1, 1], [], []>} : vector<16x16xf32>, vector<16x10xf32>, vector<16x10xf32> -> vector<16x10xf32>
    %c0_38 = arith.constant 0 : index
    %c50 = arith.constant 50 : index
    %66 = vector.load %arg11[%c0_38, %c50] : memref<16x128xf32, #tpu.memory_space<vmem>>, vector<16x10xf32>
    tpu.vector_store %arg11[%c0_38, %c50], %65 {strides = array<i32>} : memref<16x128xf32, #tpu.memory_space<vmem>>, vector<16x10xf32>,
    %67 = vector.extract_strided_slice %48 {offsets = [0, 180], sizes = [16, 16], strides = [1, 1]} : vector<16x384xf32> to vector<16x16xf32>
    %cst_39 = arith.constant dense<0.000000e+00> : vector<16x10xf32>
    %68 = tpu.matmul %67, %51, %cst_39 {dimension_numbers = #tpu.dot_dimension_numbers<[1], [0], [0], [1], [0, 0, 1, 1], [], []>} : vector<16x16xf32>, vector<16x10xf32>, vector<16x10xf32> -> vector<16x10xf32>
    %c0_40 = arith.constant 0 : index
    %c60 = arith.constant 60 : index
    %69 = vector.load %arg11[%c0_40, %c60] : memref<16x128xf32, #tpu.memory_space<vmem>>, vector<16x10xf32>
    tpu.vector_store %arg11[%c0_40, %c60], %68 {strides = array<i32>} : memref<16x128xf32, #tpu.memory_space<vmem>>, vector<16x10xf32>,
    %70 = vector.extract_strided_slice %48 {offsets = [0, 216], sizes = [16, 16], strides = [1, 1]} : vector<16x384xf32> to vector<16x16xf32>
    %cst_41 = arith.constant dense<0.000000e+00> : vector<16x10xf32>
    %71 = tpu.matmul %70, %51, %cst_41 {dimension_numbers = #tpu.dot_dimension_numbers<[1], [0], [0], [1], [0, 0, 1, 1], [], []>} : vector<16x16xf32>, vector<16x10xf32>, vector<16x10xf32> -> vector<16x10xf32>
    %c0_42 = arith.constant 0 : index
    %c70 = arith.constant 70 : index
    %72 = vector.load %arg11[%c0_42, %c70] : memref<16x128xf32, #tpu.memory_space<vmem>>, vector<16x10xf32>
    tpu.vector_store %arg11[%c0_42, %c70], %71 {strides = array<i32>} : memref<16x128xf32, #tpu.memory_space<vmem>>, vector<16x10xf32>,
    %73 = vector.extract_strided_slice %48 {offsets = [0, 252], sizes = [16, 16], strides = [1, 1]} : vector<16x384xf32> to vector<16x16xf32>
    %cst_43 = arith.constant dense<0.000000e+00> : vector<16x10xf32>
    %74 = tpu.matmul %73, %51, %cst_43 {dimension_numbers = #tpu.dot_dimension_numbers<[1], [0], [0], [1], [0, 0, 1, 1], [], []>} : vector<16x16xf32>, vector<16x10xf32>, vector<16x10xf32> -> vector<16x10xf32>
    %c0_44 = arith.constant 0 : index
    %c80_45 = arith.constant 80 : index
    %75 = vector.load %arg11[%c0_44, %c80_45] : memref<16x128xf32, #tpu.memory_space<vmem>>, vector<16x10xf32>
    tpu.vector_store %arg11[%c0_44, %c80_45], %74 {strides = array<i32>} : memref<16x128xf32, #tpu.memory_space<vmem>>, vector<16x10xf32>,
    %c0_46 = arith.constant 0 : index
    %c0_47 = arith.constant 0 : index
    %76 = vector.load %arg11[%c0_46, %c0_47] : memref<16x128xf32, #tpu.memory_space<vmem>>, vector<16x128xf32>
    %c0_48 = arith.constant 0 : index
    %c0_49 = arith.constant 0 : index
    %77 = vector.load %arg7[%c0_48, %c0_49] : memref<1x128xf32, #tpu.memory_space<vmem>>, vector<1x128xf32>
    %cst_50 = arith.constant 0.000000e+00 : f32
    %78 = vector.broadcast %cst_50 : f32 to vector<16x128xf32>
    %79 = arith.maximumf %76, %78 : vector<16x128xf32>
    %c0_51 = arith.constant 0 : index
    %c0_52 = arith.constant 0 : index
    %c0_53 = arith.constant 0 : index
    %80 = vector.load %arg4[%c0_51, %c0_52, %c0_53] : memref<4x16x144xbf16, #tpu.memory_space<vmem>>, vector<1x16x144xbf16>
    %81 = vector.shape_cast %80 : vector<1x16x144xbf16> to vector<16x144xbf16>
    %c0_54 = arith.constant 0 : index
    %c0_55 = arith.constant 0 : index
    %c0_56 = arith.constant 0 : index
    %82 = vector.load %arg5[%c0_54, %c0_55, %c0_56] : memref<4x16x1xf32, #tpu.memory_space<vmem>>, vector<1x16x1xf32>
    %83 = vector.shape_cast %82 : vector<1x16x1xf32> to vector<16x1xf32>
    %c11_i32 = arith.constant 11 : i32
    %84 = tpu.dynamic_rotate %79 by %c11_i32 dim 1 : vector<16x128xf32>, i32 -> vector<16x128xf32>
    %85 = arith.truncf %84 : vector<16x128xf32> to vector<16x128xbf16>
    %c0_57 = arith.constant 0 : index
    %c0_58 = arith.constant 0 : index
    %86 = vector.load %arg10[%c0_57, %c0_58] : memref<144x384xbf16, #tpu.memory_space<vmem>>, vector<16x128xbf16>
    tpu.vector_store %arg10[%c0_57, %c0_58], %85 {strides = array<i32>} : memref<144x384xbf16, #tpu.memory_space<vmem>>, vector<16x128xbf16>,
    %c10_i32 = arith.constant 10 : i32
    %87 = tpu.dynamic_rotate %79 by %c10_i32 dim 1 : vector<16x128xf32>, i32 -> vector<16x128xf32>
    %88 = arith.truncf %87 : vector<16x128xf32> to vector<16x128xbf16>
    %c16_59 = arith.constant 16 : index
    %c0_60 = arith.constant 0 : index
    %89 = vector.load %arg10[%c16_59, %c0_60] : memref<144x384xbf16, #tpu.memory_space<vmem>>, vector<16x128xbf16>
    tpu.vector_store %arg10[%c16_59, %c0_60], %88 {strides = array<i32>} : memref<144x384xbf16, #tpu.memory_space<vmem>>, vector<16x128xbf16>,
    %c9_i32 = arith.constant 9 : i32
    %90 = tpu.dynamic_rotate %79 by %c9_i32 dim 1 : vector<16x128xf32>, i32 -> vector<16x128xf32>
    %91 = arith.truncf %90 : vector<16x128xf32> to vector<16x128xbf16>
    %c32_61 = arith.constant 32 : index
    %c0_62 = arith.constant 0 : index
    %92 = vector.load %arg10[%c32_61, %c0_62] : memref<144x384xbf16, #tpu.memory_space<vmem>>, vector<16x128xbf16>
    tpu.vector_store %arg10[%c32_61, %c0_62], %91 {strides = array<i32>} : memref<144x384xbf16, #tpu.memory_space<vmem>>, vector<16x128xbf16>,
    %c1_i32_63 = arith.constant 1 : i32
    %93 = tpu.dynamic_rotate %79 by %c1_i32_63 dim 1 : vector<16x128xf32>, i32 -> vector<16x128xf32>
    %94 = arith.truncf %93 : vector<16x128xf32> to vector<16x128xbf16>
    %c48_64 = arith.constant 48 : index
    %c0_65 = arith.constant 0 : index
    %95 = vector.load %arg10[%c48_64, %c0_65] : memref<144x384xbf16, #tpu.memory_space<vmem>>, vector<16x128xbf16>
    tpu.vector_store %arg10[%c48_64, %c0_65], %94 {strides = array<i32>} : memref<144x384xbf16, #tpu.memory_space<vmem>>, vector<16x128xbf16>,
    %96 = arith.truncf %79 : vector<16x128xf32> to vector<16x128xbf16>
    %c64_66 = arith.constant 64 : index
    %c0_67 = arith.constant 0 : index
    %97 = vector.load %arg10[%c64_66, %c0_67] : memref<144x384xbf16, #tpu.memory_space<vmem>>, vector<16x128xbf16>
    tpu.vector_store %arg10[%c64_66, %c0_67], %96 {strides = array<i32>} : memref<144x384xbf16, #tpu.memory_space<vmem>>, vector<16x128xbf16>,
    %c127_i32 = arith.constant 127 : i32
    %98 = tpu.dynamic_rotate %79 by %c127_i32 dim 1 : vector<16x128xf32>, i32 -> vector<16x128xf32>
    %99 = arith.truncf %98 : vector<16x128xf32> to vector<16x128xbf16>
    %c80_68 = arith.constant 80 : index
    %c0_69 = arith.constant 0 : index
    %100 = vector.load %arg10[%c80_68, %c0_69] : memref<144x384xbf16, #tpu.memory_space<vmem>>, vector<16x128xbf16>
    tpu.vector_store %arg10[%c80_68, %c0_69], %99 {strides = array<i32>} : memref<144x384xbf16, #tpu.memory_space<vmem>>, vector<16x128xbf16>,
    %c119_i32 = arith.constant 119 : i32
    %101 = tpu.dynamic_rotate %79 by %c119_i32 dim 1 : vector<16x128xf32>, i32 -> vector<16x128xf32>
    %102 = arith.truncf %101 : vector<16x128xf32> to vector<16x128xbf16>
    %c96_70 = arith.constant 96 : index
    %c0_71 = arith.constant 0 : index
    %103 = vector.load %arg10[%c96_70, %c0_71] : memref<144x384xbf16, #tpu.memory_space<vmem>>, vector<16x128xbf16>
    tpu.vector_store %arg10[%c96_70, %c0_71], %102 {strides = array<i32>} : memref<144x384xbf16, #tpu.memory_space<vmem>>, vector<16x128xbf16>,
    %c118_i32 = arith.constant 118 : i32
    %104 = tpu.dynamic_rotate %79 by %c118_i32 dim 1 : vector<16x128xf32>, i32 -> vector<16x128xf32>
    %105 = arith.truncf %104 : vector<16x128xf32> to vector<16x128xbf16>
    %c112_72 = arith.constant 112 : index
    %c0_73 = arith.constant 0 : index
    %106 = vector.load %arg10[%c112_72, %c0_73] : memref<144x384xbf16, #tpu.memory_space<vmem>>, vector<16x128xbf16>
    tpu.vector_store %arg10[%c112_72, %c0_73], %105 {strides = array<i32>} : memref<144x384xbf16, #tpu.memory_space<vmem>>, vector<16x128xbf16>,
    %c117_i32 = arith.constant 117 : i32
    %107 = tpu.dynamic_rotate %79 by %c117_i32 dim 1 : vector<16x128xf32>, i32 -> vector<16x128xf32>
    %108 = arith.truncf %107 : vector<16x128xf32> to vector<16x128xbf16>
    %c128_74 = arith.constant 128 : index
    %c0_75 = arith.constant 0 : index
    %109 = vector.load %arg10[%c128_74, %c0_75] : memref<144x384xbf16, #tpu.memory_space<vmem>>, vector<16x128xbf16>
    tpu.vector_store %arg10[%c128_74, %c0_75], %108 {strides = array<i32>} : memref<144x384xbf16, #tpu.memory_space<vmem>>, vector<16x128xbf16>,
    %c0_76 = arith.constant 0 : index
    %c0_77 = arith.constant 0 : index
    %110 = vector.load %arg10[%c0_76, %c0_77] : memref<144x384xbf16, #tpu.memory_space<vmem>>, vector<144x128xbf16>
    %cst_78 = arith.constant dense<0.000000e+00> : vector<16x128xf32>
    %111 = tpu.matmul %81, %110, %cst_78 {dimension_numbers = #tpu.dot_dimension_numbers<[1], [0], [0], [1], [0, 0, 1, 1], [], []>} : vector<16x144xbf16>, vector<144x128xbf16>, vector<16x128xf32> -> vector<16x128xf32>
    %112 = vector.broadcast %83 : vector<16x1xf32> to vector<16x128xf32>
    %113 = arith.addf %111, %112 : vector<16x128xf32>
    %cst_79 = arith.constant 0.000000e+00 : f32
    %114 = vector.broadcast %cst_79 : f32 to vector<16x128xf32>
    %115 = arith.maximumf %113, %114 : vector<16x128xf32>
    %116 = vector.broadcast %77 : vector<1x128xf32> to vector<16x128xf32>
    %117 = arith.mulf %115, %116 : vector<16x128xf32>
    %c1 = arith.constant 1 : index
    %c0_80 = arith.constant 0 : index
    %c0_81 = arith.constant 0 : index
    %118 = vector.load %arg4[%c1, %c0_80, %c0_81] : memref<4x16x144xbf16, #tpu.memory_space<vmem>>, vector<1x16x144xbf16>
    %119 = vector.shape_cast %118 : vector<1x16x144xbf16> to vector<16x144xbf16>
    %c1_82 = arith.constant 1 : index
    %c0_83 = arith.constant 0 : index
    %c0_84 = arith.constant 0 : index
    %120 = vector.load %arg5[%c1_82, %c0_83, %c0_84] : memref<4x16x1xf32, #tpu.memory_space<vmem>>, vector<1x16x1xf32>
    %121 = vector.shape_cast %120 : vector<1x16x1xf32> to vector<16x1xf32>
    %c11_i32_85 = arith.constant 11 : i32
    %122 = tpu.dynamic_rotate %117 by %c11_i32_85 dim 1 : vector<16x128xf32>, i32 -> vector<16x128xf32>
    %123 = arith.truncf %122 : vector<16x128xf32> to vector<16x128xbf16>
    %c0_86 = arith.constant 0 : index
    %c0_87 = arith.constant 0 : index
    %124 = vector.load %arg10[%c0_86, %c0_87] : memref<144x384xbf16, #tpu.memory_space<vmem>>, vector<16x128xbf16>
    tpu.vector_store %arg10[%c0_86, %c0_87], %123 {strides = array<i32>} : memref<144x384xbf16, #tpu.memory_space<vmem>>, vector<16x128xbf16>,
    %c10_i32_88 = arith.constant 10 : i32
    %125 = tpu.dynamic_rotate %117 by %c10_i32_88 dim 1 : vector<16x128xf32>, i32 -> vector<16x128xf32>
    %126 = arith.truncf %125 : vector<16x128xf32> to vector<16x128xbf16>
    %c16_89 = arith.constant 16 : index
    %c0_90 = arith.constant 0 : index
    %127 = vector.load %arg10[%c16_89, %c0_90] : memref<144x384xbf16, #tpu.memory_space<vmem>>, vector<16x128xbf16>
    tpu.vector_store %arg10[%c16_89, %c0_90], %126 {strides = array<i32>} : memref<144x384xbf16, #tpu.memory_space<vmem>>, vector<16x128xbf16>,
    %c9_i32_91 = arith.constant 9 : i32
    %128 = tpu.dynamic_rotate %117 by %c9_i32_91 dim 1 : vector<16x128xf32>, i32 -> vector<16x128xf32>
    %129 = arith.truncf %128 : vector<16x128xf32> to vector<16x128xbf16>
    %c32_92 = arith.constant 32 : index
    %c0_93 = arith.constant 0 : index
    %130 = vector.load %arg10[%c32_92, %c0_93] : memref<144x384xbf16, #tpu.memory_space<vmem>>, vector<16x128xbf16>
    tpu.vector_store %arg10[%c32_92, %c0_93], %129 {strides = array<i32>} : memref<144x384xbf16, #tpu.memory_space<vmem>>, vector<16x128xbf16>,
    %c1_i32_94 = arith.constant 1 : i32
    %131 = tpu.dynamic_rotate %117 by %c1_i32_94 dim 1 : vector<16x128xf32>, i32 -> vector<16x128xf32>
    %132 = arith.truncf %131 : vector<16x128xf32> to vector<16x128xbf16>
    %c48_95 = arith.constant 48 : index
    %c0_96 = arith.constant 0 : index
    %133 = vector.load %arg10[%c48_95, %c0_96] : memref<144x384xbf16, #tpu.memory_space<vmem>>, vector<16x128xbf16>
    tpu.vector_store %arg10[%c48_95, %c0_96], %132 {strides = array<i32>} : memref<144x384xbf16, #tpu.memory_space<vmem>>, vector<16x128xbf16>,
    %134 = arith.truncf %117 : vector<16x128xf32> to vector<16x128xbf16>
    %c64_97 = arith.constant 64 : index
    %c0_98 = arith.constant 0 : index
    %135 = vector.load %arg10[%c64_97, %c0_98] : memref<144x384xbf16, #tpu.memory_space<vmem>>, vector<16x128xbf16>
    tpu.vector_store %arg10[%c64_97, %c0_98], %134 {strides = array<i32>} : memref<144x384xbf16, #tpu.memory_space<vmem>>, vector<16x128xbf16>,
    %c127_i32_99 = arith.constant 127 : i32
    %136 = tpu.dynamic_rotate %117 by %c127_i32_99 dim 1 : vector<16x128xf32>, i32 -> vector<16x128xf32>
    %137 = arith.truncf %136 : vector<16x128xf32> to vector<16x128xbf16>
    %c80_100 = arith.constant 80 : index
    %c0_101 = arith.constant 0 : index
    %138 = vector.load %arg10[%c80_100, %c0_101] : memref<144x384xbf16, #tpu.memory_space<vmem>>, vector<16x128xbf16>
    tpu.vector_store %arg10[%c80_100, %c0_101], %137 {strides = array<i32>} : memref<144x384xbf16, #tpu.memory_space<vmem>>, vector<16x128xbf16>,
    %c119_i32_102 = arith.constant 119 : i32
    %139 = tpu.dynamic_rotate %117 by %c119_i32_102 dim 1 : vector<16x128xf32>, i32 -> vector<16x128xf32>
    %140 = arith.truncf %139 : vector<16x128xf32> to vector<16x128xbf16>
    %c96_103 = arith.constant 96 : index
    %c0_104 = arith.constant 0 : index
    %141 = vector.load %arg10[%c96_103, %c0_104] : memref<144x384xbf16, #tpu.memory_space<vmem>>, vector<16x128xbf16>
    tpu.vector_store %arg10[%c96_103, %c0_104], %140 {strides = array<i32>} : memref<144x384xbf16, #tpu.memory_space<vmem>>, vector<16x128xbf16>,
    %c118_i32_105 = arith.constant 118 : i32
    %142 = tpu.dynamic_rotate %117 by %c118_i32_105 dim 1 : vector<16x128xf32>, i32 -> vector<16x128xf32>
    %143 = arith.truncf %142 : vector<16x128xf32> to vector<16x128xbf16>
    %c112_106 = arith.constant 112 : index
    %c0_107 = arith.constant 0 : index
    %144 = vector.load %arg10[%c112_106, %c0_107] : memref<144x384xbf16, #tpu.memory_space<vmem>>, vector<16x128xbf16>
    tpu.vector_store %arg10[%c112_106, %c0_107], %143 {strides = array<i32>} : memref<144x384xbf16, #tpu.memory_space<vmem>>, vector<16x128xbf16>,
    %c117_i32_108 = arith.constant 117 : i32
    %145 = tpu.dynamic_rotate %117 by %c117_i32_108 dim 1 : vector<16x128xf32>, i32 -> vector<16x128xf32>
    %146 = arith.truncf %145 : vector<16x128xf32> to vector<16x128xbf16>
    %c128_109 = arith.constant 128 : index
    %c0_110 = arith.constant 0 : index
    %147 = vector.load %arg10[%c128_109, %c0_110] : memref<144x384xbf16, #tpu.memory_space<vmem>>, vector<16x128xbf16>
    tpu.vector_store %arg10[%c128_109, %c0_110], %146 {strides = array<i32>} : memref<144x384xbf16, #tpu.memory_space<vmem>>, vector<16x128xbf16>,
    %c0_111 = arith.constant 0 : index
    %c0_112 = arith.constant 0 : index
    %148 = vector.load %arg10[%c0_111, %c0_112] : memref<144x384xbf16, #tpu.memory_space<vmem>>, vector<144x128xbf16>
    %cst_113 = arith.constant dense<0.000000e+00> : vector<16x128xf32>
    %149 = tpu.matmul %119, %148, %cst_113 {dimension_numbers = #tpu.dot_dimension_numbers<[1], [0], [0], [1], [0, 0, 1, 1], [], []>} : vector<16x144xbf16>, vector<144x128xbf16>, vector<16x128xf32> -> vector<16x128xf32>
    %150 = vector.broadcast %121 : vector<16x1xf32> to vector<16x128xf32>
    %151 = arith.addf %149, %150 : vector<16x128xf32>
    %152 = vector.broadcast %77 : vector<1x128xf32> to vector<16x128xf32>
    %153 = arith.mulf %151, %152 : vector<16x128xf32>
    %154 = arith.addf %76, %153 : vector<16x128xf32>
    %cst_114 = arith.constant 0.000000e+00 : f32
    %155 = vector.broadcast %cst_114 : f32 to vector<16x128xf32>
    %156 = arith.maximumf %154, %155 : vector<16x128xf32>
    %c2 = arith.constant 2 : index
    %c0_115 = arith.constant 0 : index
    %c0_116 = arith.constant 0 : index
    %157 = vector.load %arg4[%c2, %c0_115, %c0_116] : memref<4x16x144xbf16, #tpu.memory_space<vmem>>, vector<1x16x144xbf16>
    %158 = vector.shape_cast %157 : vector<1x16x144xbf16> to vector<16x144xbf16>
    %c2_117 = arith.constant 2 : index
    %c0_118 = arith.constant 0 : index
    %c0_119 = arith.constant 0 : index
    %159 = vector.load %arg5[%c2_117, %c0_118, %c0_119] : memref<4x16x1xf32, #tpu.memory_space<vmem>>, vector<1x16x1xf32>
    %160 = vector.shape_cast %159 : vector<1x16x1xf32> to vector<16x1xf32>
    %c11_i32_120 = arith.constant 11 : i32
    %161 = tpu.dynamic_rotate %156 by %c11_i32_120 dim 1 : vector<16x128xf32>, i32 -> vector<16x128xf32>
    %162 = arith.truncf %161 : vector<16x128xf32> to vector<16x128xbf16>
    %c0_121 = arith.constant 0 : index
    %c0_122 = arith.constant 0 : index
    %163 = vector.load %arg10[%c0_121, %c0_122] : memref<144x384xbf16, #tpu.memory_space<vmem>>, vector<16x128xbf16>
    tpu.vector_store %arg10[%c0_121, %c0_122], %162 {strides = array<i32>} : memref<144x384xbf16, #tpu.memory_space<vmem>>, vector<16x128xbf16>,
    %c10_i32_123 = arith.constant 10 : i32
    %164 = tpu.dynamic_rotate %156 by %c10_i32_123 dim 1 : vector<16x128xf32>, i32 -> vector<16x128xf32>
    %165 = arith.truncf %164 : vector<16x128xf32> to vector<16x128xbf16>
    %c16_124 = arith.constant 16 : index
    %c0_125 = arith.constant 0 : index
    %166 = vector.load %arg10[%c16_124, %c0_125] : memref<144x384xbf16, #tpu.memory_space<vmem>>, vector<16x128xbf16>
    tpu.vector_store %arg10[%c16_124, %c0_125], %165 {strides = array<i32>} : memref<144x384xbf16, #tpu.memory_space<vmem>>, vector<16x128xbf16>,
    %c9_i32_126 = arith.constant 9 : i32
    %167 = tpu.dynamic_rotate %156 by %c9_i32_126 dim 1 : vector<16x128xf32>, i32 -> vector<16x128xf32>
    %168 = arith.truncf %167 : vector<16x128xf32> to vector<16x128xbf16>
    %c32_127 = arith.constant 32 : index
    %c0_128 = arith.constant 0 : index
    %169 = vector.load %arg10[%c32_127, %c0_128] : memref<144x384xbf16, #tpu.memory_space<vmem>>, vector<16x128xbf16>
    tpu.vector_store %arg10[%c32_127, %c0_128], %168 {strides = array<i32>} : memref<144x384xbf16, #tpu.memory_space<vmem>>, vector<16x128xbf16>,
    %c1_i32_129 = arith.constant 1 : i32
    %170 = tpu.dynamic_rotate %156 by %c1_i32_129 dim 1 : vector<16x128xf32>, i32 -> vector<16x128xf32>
    %171 = arith.truncf %170 : vector<16x128xf32> to vector<16x128xbf16>
    %c48_130 = arith.constant 48 : index
    %c0_131 = arith.constant 0 : index
    %172 = vector.load %arg10[%c48_130, %c0_131] : memref<144x384xbf16, #tpu.memory_space<vmem>>, vector<16x128xbf16>
    tpu.vector_store %arg10[%c48_130, %c0_131], %171 {strides = array<i32>} : memref<144x384xbf16, #tpu.memory_space<vmem>>, vector<16x128xbf16>,
    %173 = arith.truncf %156 : vector<16x128xf32> to vector<16x128xbf16>
    %c64_132 = arith.constant 64 : index
    %c0_133 = arith.constant 0 : index
    %174 = vector.load %arg10[%c64_132, %c0_133] : memref<144x384xbf16, #tpu.memory_space<vmem>>, vector<16x128xbf16>
    tpu.vector_store %arg10[%c64_132, %c0_133], %173 {strides = array<i32>} : memref<144x384xbf16, #tpu.memory_space<vmem>>, vector<16x128xbf16>,
    %c127_i32_134 = arith.constant 127 : i32
    %175 = tpu.dynamic_rotate %156 by %c127_i32_134 dim 1 : vector<16x128xf32>, i32 -> vector<16x128xf32>
    %176 = arith.truncf %175 : vector<16x128xf32> to vector<16x128xbf16>
    %c80_135 = arith.constant 80 : index
    %c0_136 = arith.constant 0 : index
    %177 = vector.load %arg10[%c80_135, %c0_136] : memref<144x384xbf16, #tpu.memory_space<vmem>>, vector<16x128xbf16>
    tpu.vector_store %arg10[%c80_135, %c0_136], %176 {strides = array<i32>} : memref<144x384xbf16, #tpu.memory_space<vmem>>, vector<16x128xbf16>,
    %c119_i32_137 = arith.constant 119 : i32
    %178 = tpu.dynamic_rotate %156 by %c119_i32_137 dim 1 : vector<16x128xf32>, i32 -> vector<16x128xf32>
    %179 = arith.truncf %178 : vector<16x128xf32> to vector<16x128xbf16>
    %c96_138 = arith.constant 96 : index
    %c0_139 = arith.constant 0 : index
    %180 = vector.load %arg10[%c96_138, %c0_139] : memref<144x384xbf16, #tpu.memory_space<vmem>>, vector<16x128xbf16>
    tpu.vector_store %arg10[%c96_138, %c0_139], %179 {strides = array<i32>} : memref<144x384xbf16, #tpu.memory_space<vmem>>, vector<16x128xbf16>,
    %c118_i32_140 = arith.constant 118 : i32
    %181 = tpu.dynamic_rotate %156 by %c118_i32_140 dim 1 : vector<16x128xf32>, i32 -> vector<16x128xf32>
    %182 = arith.truncf %181 : vector<16x128xf32> to vector<16x128xbf16>
    %c112_141 = arith.constant 112 : index
    %c0_142 = arith.constant 0 : index
    %183 = vector.load %arg10[%c112_141, %c0_142] : memref<144x384xbf16, #tpu.memory_space<vmem>>, vector<16x128xbf16>
    tpu.vector_store %arg10[%c112_141, %c0_142], %182 {strides = array<i32>} : memref<144x384xbf16, #tpu.memory_space<vmem>>, vector<16x128xbf16>,
    %c117_i32_143 = arith.constant 117 : i32
    %184 = tpu.dynamic_rotate %156 by %c117_i32_143 dim 1 : vector<16x128xf32>, i32 -> vector<16x128xf32>
    %185 = arith.truncf %184 : vector<16x128xf32> to vector<16x128xbf16>
    %c128_144 = arith.constant 128 : index
    %c0_145 = arith.constant 0 : index
    %186 = vector.load %arg10[%c128_144, %c0_145] : memref<144x384xbf16, #tpu.memory_space<vmem>>, vector<16x128xbf16>
    tpu.vector_store %arg10[%c128_144, %c0_145], %185 {strides = array<i32>} : memref<144x384xbf16, #tpu.memory_space<vmem>>, vector<16x128xbf16>,
    %c0_146 = arith.constant 0 : index
    %c0_147 = arith.constant 0 : index
    %187 = vector.load %arg10[%c0_146, %c0_147] : memref<144x384xbf16, #tpu.memory_space<vmem>>, vector<144x128xbf16>
    %cst_148 = arith.constant dense<0.000000e+00> : vector<16x128xf32>
    %188 = tpu.matmul %158, %187, %cst_148 {dimension_numbers = #tpu.dot_dimension_numbers<[1], [0], [0], [1], [0, 0, 1, 1], [], []>} : vector<16x144xbf16>, vector<144x128xbf16>, vector<16x128xf32> -> vector<16x128xf32>
    %189 = vector.broadcast %160 : vector<16x1xf32> to vector<16x128xf32>
    %190 = arith.addf %188, %189 : vector<16x128xf32>
    %cst_149 = arith.constant 0.000000e+00 : f32
    %191 = vector.broadcast %cst_149 : f32 to vector<16x128xf32>
    %192 = arith.maximumf %190, %191 : vector<16x128xf32>
    %193 = vector.broadcast %77 : vector<1x128xf32> to vector<16x128xf32>
    %194 = arith.mulf %192, %193 : vector<16x128xf32>
    %c3 = arith.constant 3 : index
    %c0_150 = arith.constant 0 : index
    %c0_151 = arith.constant 0 : index
    %195 = vector.load %arg4[%c3, %c0_150, %c0_151] : memref<4x16x144xbf16, #tpu.memory_space<vmem>>, vector<1x16x144xbf16>
    %196 = vector.shape_cast %195 : vector<1x16x144xbf16> to vector<16x144xbf16>
    %c3_152 = arith.constant 3 : index
    %c0_153 = arith.constant 0 : index
    %c0_154 = arith.constant 0 : index
    %197 = vector.load %arg5[%c3_152, %c0_153, %c0_154] : memref<4x16x1xf32, #tpu.memory_space<vmem>>, vector<1x16x1xf32>
    %198 = vector.shape_cast %197 : vector<1x16x1xf32> to vector<16x1xf32>
    %c11_i32_155 = arith.constant 11 : i32
    %199 = tpu.dynamic_rotate %194 by %c11_i32_155 dim 1 : vector<16x128xf32>, i32 -> vector<16x128xf32>
    %200 = arith.truncf %199 : vector<16x128xf32> to vector<16x128xbf16>
    %c0_156 = arith.constant 0 : index
    %c0_157 = arith.constant 0 : index
    %201 = vector.load %arg10[%c0_156, %c0_157] : memref<144x384xbf16, #tpu.memory_space<vmem>>, vector<16x128xbf16>
    tpu.vector_store %arg10[%c0_156, %c0_157], %200 {strides = array<i32>} : memref<144x384xbf16, #tpu.memory_space<vmem>>, vector<16x128xbf16>,
    %c10_i32_158 = arith.constant 10 : i32
    %202 = tpu.dynamic_rotate %194 by %c10_i32_158 dim 1 : vector<16x128xf32>, i32 -> vector<16x128xf32>
    %203 = arith.truncf %202 : vector<16x128xf32> to vector<16x128xbf16>
    %c16_159 = arith.constant 16 : index
    %c0_160 = arith.constant 0 : index
    %204 = vector.load %arg10[%c16_159, %c0_160] : memref<144x384xbf16, #tpu.memory_space<vmem>>, vector<16x128xbf16>
    tpu.vector_store %arg10[%c16_159, %c0_160], %203 {strides = array<i32>} : memref<144x384xbf16, #tpu.memory_space<vmem>>, vector<16x128xbf16>,
    %c9_i32_161 = arith.constant 9 : i32
    %205 = tpu.dynamic_rotate %194 by %c9_i32_161 dim 1 : vector<16x128xf32>, i32 -> vector<16x128xf32>
    %206 = arith.truncf %205 : vector<16x128xf32> to vector<16x128xbf16>
    %c32_162 = arith.constant 32 : index
    %c0_163 = arith.constant 0 : index
    %207 = vector.load %arg10[%c32_162, %c0_163] : memref<144x384xbf16, #tpu.memory_space<vmem>>, vector<16x128xbf16>
    tpu.vector_store %arg10[%c32_162, %c0_163], %206 {strides = array<i32>} : memref<144x384xbf16, #tpu.memory_space<vmem>>, vector<16x128xbf16>,
    %c1_i32_164 = arith.constant 1 : i32
    %208 = tpu.dynamic_rotate %194 by %c1_i32_164 dim 1 : vector<16x128xf32>, i32 -> vector<16x128xf32>
    %209 = arith.truncf %208 : vector<16x128xf32> to vector<16x128xbf16>
    %c48_165 = arith.constant 48 : index
    %c0_166 = arith.constant 0 : index
    %210 = vector.load %arg10[%c48_165, %c0_166] : memref<144x384xbf16, #tpu.memory_space<vmem>>, vector<16x128xbf16>
    tpu.vector_store %arg10[%c48_165, %c0_166], %209 {strides = array<i32>} : memref<144x384xbf16, #tpu.memory_space<vmem>>, vector<16x128xbf16>,
    %211 = arith.truncf %194 : vector<16x128xf32> to vector<16x128xbf16>
    %c64_167 = arith.constant 64 : index
    %c0_168 = arith.constant 0 : index
    %212 = vector.load %arg10[%c64_167, %c0_168] : memref<144x384xbf16, #tpu.memory_space<vmem>>, vector<16x128xbf16>
    tpu.vector_store %arg10[%c64_167, %c0_168], %211 {strides = array<i32>} : memref<144x384xbf16, #tpu.memory_space<vmem>>, vector<16x128xbf16>,
    %c127_i32_169 = arith.constant 127 : i32
    %213 = tpu.dynamic_rotate %194 by %c127_i32_169 dim 1 : vector<16x128xf32>, i32 -> vector<16x128xf32>
    %214 = arith.truncf %213 : vector<16x128xf32> to vector<16x128xbf16>
    %c80_170 = arith.constant 80 : index
    %c0_171 = arith.constant 0 : index
    %215 = vector.load %arg10[%c80_170, %c0_171] : memref<144x384xbf16, #tpu.memory_space<vmem>>, vector<16x128xbf16>
    tpu.vector_store %arg10[%c80_170, %c0_171], %214 {strides = array<i32>} : memref<144x384xbf16, #tpu.memory_space<vmem>>, vector<16x128xbf16>,
    %c119_i32_172 = arith.constant 119 : i32
    %216 = tpu.dynamic_rotate %194 by %c119_i32_172 dim 1 : vector<16x128xf32>, i32 -> vector<16x128xf32>
    %217 = arith.truncf %216 : vector<16x128xf32> to vector<16x128xbf16>
    %c96_173 = arith.constant 96 : index
    %c0_174 = arith.constant 0 : index
    %218 = vector.load %arg10[%c96_173, %c0_174] : memref<144x384xbf16, #tpu.memory_space<vmem>>, vector<16x128xbf16>
    tpu.vector_store %arg10[%c96_173, %c0_174], %217 {strides = array<i32>} : memref<144x384xbf16, #tpu.memory_space<vmem>>, vector<16x128xbf16>,
    %c118_i32_175 = arith.constant 118 : i32
    %219 = tpu.dynamic_rotate %194 by %c118_i32_175 dim 1 : vector<16x128xf32>, i32 -> vector<16x128xf32>
    %220 = arith.truncf %219 : vector<16x128xf32> to vector<16x128xbf16>
    %c112_176 = arith.constant 112 : index
    %c0_177 = arith.constant 0 : index
    %221 = vector.load %arg10[%c112_176, %c0_177] : memref<144x384xbf16, #tpu.memory_space<vmem>>, vector<16x128xbf16>
    tpu.vector_store %arg10[%c112_176, %c0_177], %220 {strides = array<i32>} : memref<144x384xbf16, #tpu.memory_space<vmem>>, vector<16x128xbf16>,
    %c117_i32_178 = arith.constant 117 : i32
    %222 = tpu.dynamic_rotate %194 by %c117_i32_178 dim 1 : vector<16x128xf32>, i32 -> vector<16x128xf32>
    %223 = arith.truncf %222 : vector<16x128xf32> to vector<16x128xbf16>
    %c128_179 = arith.constant 128 : index
    %c0_180 = arith.constant 0 : index
    %224 = vector.load %arg10[%c128_179, %c0_180] : memref<144x384xbf16, #tpu.memory_space<vmem>>, vector<16x128xbf16>
    tpu.vector_store %arg10[%c128_179, %c0_180], %223 {strides = array<i32>} : memref<144x384xbf16, #tpu.memory_space<vmem>>, vector<16x128xbf16>,
    %c0_181 = arith.constant 0 : index
    %c0_182 = arith.constant 0 : index
    %225 = vector.load %arg10[%c0_181, %c0_182] : memref<144x384xbf16, #tpu.memory_space<vmem>>, vector<144x128xbf16>
    %cst_183 = arith.constant dense<0.000000e+00> : vector<16x128xf32>
    %226 = tpu.matmul %196, %225, %cst_183 {dimension_numbers = #tpu.dot_dimension_numbers<[1], [0], [0], [1], [0, 0, 1, 1], [], []>} : vector<16x144xbf16>, vector<144x128xbf16>, vector<16x128xf32> -> vector<16x128xf32>
    %227 = vector.broadcast %198 : vector<16x1xf32> to vector<16x128xf32>
    %228 = arith.addf %226, %227 : vector<16x128xf32>
    %229 = vector.broadcast %77 : vector<1x128xf32> to vector<16x128xf32>
    %230 = arith.mulf %228, %229 : vector<16x128xf32>
    %231 = arith.addf %154, %230 : vector<16x128xf32>
    %c0_184 = arith.constant 0 : index
    %c0_185 = arith.constant 0 : index
    %c0_186 = arith.constant 0 : index
    %232 = vector.load %arg9[%c0_184, %c0_185, %c0_186] : memref<1x16x128xf32, #tpu.memory_space<vmem>>, vector<1x16x128xf32>
    %233 = vector.shape_cast %232 : vector<1x16x128xf32> to vector<16x128xf32>
    %234 = vector.shape_cast %231 : vector<16x128xf32> to vector<1x16x128xf32>
    tpu.vector_store %arg9[%c0_184, %c0_185, %c0_186], %234 {strides = array<i32>} : memref<1x16x128xf32, #tpu.memory_space<vmem>>, vector<1x16x128xf32>,
    return
  }
  func.func @transform_0(%arg0: i32) -> (i32, i32, i32) {
    %c0_i32 = arith.constant 0 : i32
    %c0_i32_0 = arith.constant 0 : i32
    %c0_i32_1 = arith.constant 0 : i32
    return %arg0, %c0_i32, %c0_i32_0 : i32, i32, i32
  }
  func.func @transform_1(%arg0: i32) -> (i32, i32) {
    %c0_i32 = arith.constant 0 : i32
    %c0_i32_0 = arith.constant 0 : i32
    %c0_i32_1 = arith.constant 0 : i32
    return %c0_i32, %c0_i32_0 : i32, i32
  }
  func.func @transform_2(%arg0: i32) -> (i32, i32) {
    %c0_i32 = arith.constant 0 : i32
    %c0_i32_0 = arith.constant 0 : i32
    %c0_i32_1 = arith.constant 0 : i32
    return %c0_i32, %c0_i32_0 : i32, i32
  }
  func.func @transform_3(%arg0: i32) -> (i32, i32, i32) {
    %c0_i32 = arith.constant 0 : i32
    %c0_i32_0 = arith.constant 0 : i32
    %c0_i32_1 = arith.constant 0 : i32
    %c0_i32_2 = arith.constant 0 : i32
    return %c0_i32, %c0_i32_0, %c0_i32_1 : i32, i32, i32
  }
  func.func @transform_4(%arg0: i32) -> (i32, i32, i32) {
    %c0_i32 = arith.constant 0 : i32
    %c0_i32_0 = arith.constant 0 : i32
    %c0_i32_1 = arith.constant 0 : i32
    %c0_i32_2 = arith.constant 0 : i32
    return %c0_i32, %c0_i32_0, %c0_i32_1 : i32, i32, i32
  }
  func.func @transform_5(%arg0: i32) -> (i32, i32) {
    %c0_i32 = arith.constant 0 : i32
    %c0_i32_0 = arith.constant 0 : i32
    %c0_i32_1 = arith.constant 0 : i32
    return %c0_i32, %c0_i32_0 : i32, i32
  }
  func.func @transform_6(%arg0: i32) -> (i32, i32) {
    %c0_i32 = arith.constant 0 : i32
    %c0_i32_0 = arith.constant 0 : i32
    %c0_i32_1 = arith.constant 0 : i32
    return %c0_i32, %c0_i32_0 : i32, i32
  }
  func.func @transform_7(%arg0: i32) -> (i32, i32) {
    %c0_i32 = arith.constant 0 : i32
    %c0_i32_0 = arith.constant 0 : i32
    %c0_i32_1 = arith.constant 0 : i32
    return %c0_i32, %c0_i32_0 : i32, i32
  }
  func.func @transform_8(%arg0: i32) -> (i32, i32, i32) {
    %c0_i32 = arith.constant 0 : i32
    %c0_i32_0 = arith.constant 0 : i32
    %c0_i32_1 = arith.constant 0 : i32
    return %arg0, %c0_i32, %c0_i32_0 : i32, i32, i32
  }
}

</mosaic_0001>

<llo_original>
// kernel: tpu_custom_call.1
$region0: #{tpu_custom_call.1}
  #allocation0 [shape = 'u32[]', space=smem, size = 0x4, offset = 0x4, fixed_abs, tag = 'smem constant byte address 0x4 - core index']
  #allocation1 [shape = 'u32[72,128]{1,0:T(1,128)}', space=vmem, size = 0x9000, scoped, tag = 'internal scratch']
  #allocation2 [shape = 'bf16[144,384]{1,0:T(8,128)(2,1)}', space=vmem, size = 0x1b000, scoped, tag = 'scratch operand']
  #allocation3 [shape = 'f32[16,128]{1,0:T(8,128)}', space=vmem, size = 0x2000, scoped, tag = 'scratch operand']
  %s0 = inlined_call_operand.hbm [shape: f32[2,16,384], index: 0, kind: input, shape index: {}]
  %s1 = inlined_call_operand.vmem [shape: bf16[16,144], index: 1, kind: input, shape index: {}]
  %s2 = inlined_call_operand.vmem [shape: f32[16,1], index: 2, kind: input, shape index: {}]
  %s3 = inlined_call_operand.vmem [shape: bf16[4,16,144], index: 3, kind: input, shape index: {}]
  %s4 = inlined_call_operand.vmem [shape: f32[4,16,1], index: 4, kind: input, shape index: {}]
  %s5 = inlined_call_operand.vmem [shape: f32[1,384], index: 5, kind: input, shape index: {}]
  %s6 = inlined_call_operand.vmem [shape: f32[1,128], index: 6, kind: input, shape index: {}]
  %s7 = inlined_call_operand.hbm [shape: f32[16,10], index: 7, kind: input, shape index: {}]
  %s8 = inlined_call_operand.hbm [shape: f32[2,16,128], index: 8, kind: output, shape index: {}]
  %s9 = sld [smem:[#allocation0]]
  $region73: #{tpu_custom_call.1} parent=0
    _
  %s11 = ssub.s32 1, %s9
  %s12 = scalar_select 0, %s11, %s9
  $region1: #{tpu_custom_call.1} parent=0
    #allocation4 [shape = 'u8[49152]{0}', space=vmem, size = 0xc000, scoped, tag = 'input window, operand 0']
    #allocation5 [shape = 's32[2]{0}', space=sflag, size = 0x8, scoped, tag = 'scoped memory for tpu_custom_call.1']
    #allocation6 [shape = 's32[2]{0}', space=sflag, size = 0x8, scoped, tag = 'scoped memory for tpu_custom_call.1']
    #allocation7 [shape = 'u8[8192]{0}', space=vmem, size = 0x2000, scoped, tag = 'input window, operand 7, single buffered']
    #allocation8 [shape = 's32[1]{0}', space=sflag, size = 0x4, scoped, tag = 'scoped memory for tpu_custom_call.1']
    #allocation9 [shape = 'u8[16384]{0}', space=vmem, size = 0x4000, scoped, tag = 'output window, operand 0']
    %13 = vsyncpa [#allocation5], 0
    %s14 = scalar_lea.sflag [#allocation5], 1
    %15 = vsyncpa %s14, 0
    %16 = vsyncpa [#allocation8], 0
    %17 = vsyncpa [#allocation6], 0
    %s18 = scalar_lea.sflag [#allocation6], 1
    %19 = vsyncpa %s18, 0
    loop: start=0, step=1, limit=4
    $region2: #{tpu_custom_call.1} parent=1 // loop_pre_header
      _
    $region3: #{tpu_custom_call.1} parent=1 // loop_header
      %s21 = sphi 0, %s25
      %p22 = scmp.ge.s32.totalorder %s21, 4
      %s31 = sphi 0, %s33
      %s34 = sphi 0, %s31
      %s35 = sphi 0, %s34
      %s51 = sphi 0, %s35
      %s55 = sphi 0, %s55
      %s57 = sphi 0, %s55
      %s58 = sphi 0, %s57
      %s72 = sphi 0, %s58
      %s76 = sphi 0, %s76
      %s78 = sphi 0, %s76
      %s79 = sphi 0, %s78
      %s93 = sphi 0, %s79
      %s97 = sphi 0, %s97
      %s99 = sphi 0, %s97
      %s100 = sphi 0, %s99
      %s114 = sphi 0, %s100
      %s118 = sphi 0, %s118
      %s120 = sphi 0, %s118
      %s121 = sphi 0, %s120
      %s135 = sphi 0, %s121
      %s139 = sphi 0, %s139
      %s141 = sphi 0, %s139
      %s142 = sphi 0, %s141
      %s156 = sphi 0, %s142
      %s160 = sphi 0, %s160
      %s162 = sphi 0, %s160
      %s163 = sphi 0, %s162
      %s177 = sphi 0, %s163
      %s181 = sphi 0, %s181
      %s183 = sphi 0, %s181
      %s184 = sphi 0, %s183
      %s198 = sphi 0, %s184
      %s204 = sphi 0, %s206
      %s207 = sphi 0, %s204
      %s208 = sphi 0, %s207
      %s224 = sphi 0, %s208
    $region4: #{tpu_custom_call.1} parent=1 // loop_header_branch
      %24 = sbr.rel (%p22) target = $region8
    $region5: #{tpu_custom_call.1} parent=1 // loop_body
      %s26 = ssub.s32 %s21, 1
      %s27 = ssub.s32 %s21, 2
      %s28 = sadd.s32 %s21, 1
      %s29 = ssub.s32 %s21, %s28
      %p30 = scmp.eq.s32.totalorder %s29, 0
      %s32 = sadd.s32 %s31, 1
      %s33 = scalar_select %p30, %s31, %s32
      %p36 = pneg %p30
      %p37 = scmp.eq.s32.totalorder %s21, 1
      %p38 = por %p36, %p37
      %p39 = scmp.ne.s32.totalorder %s31, %s34
      %p40 = scmp.eq.s32.totalorder %s21, 0
      %p41 = por %p39, %p40
      %p42 = scmp.ne.s32.totalorder %s31, %s34
      %p43 = scmp.eq.s32.totalorder %s26, 1
      %p44 = por %p42, %p43
      %p45 = scmp.ne.s32.totalorder %s34, %s35
      %p46 = scmp.eq.s32.totalorder %s26, 0
      %p47 = por %p45, %p46
      %p48 = scmp.ne.s32.totalorder %s34, %s35
      %p49 = scmp.eq.s32.totalorder %s27, 1
      %p50 = por %p48, %p49
      %p52 = scmp.ne.s32.totalorder %s35, %s51
      %p53 = scmp.eq.s32.totalorder %s27, 0
      %p54 = por %p52, %p53
      %s56 = sadd.s32 %s55, 1
      %p59 = scmp.eq.s32.totalorder %s21, 1
      %p60 = scmp.ne.s32.totalorder %s55, %s57
      %p61 = scmp.eq.s32.totalorder %s21, 0
      %p62 = por %p60, %p61
      %p63 = scmp.ne.s32.totalorder %s55, %s57
      %p64 = scmp.eq.s32.totalorder %s26, 1
      %p65 = por %p63, %p64
      %p66 = scmp.ne.s32.totalorder %s57, %s58
      %p67 = scmp.eq.s32.totalorder %s26, 0
      %p68 = por %p66, %p67
      %p69 = scmp.ne.s32.totalorder %s57, %s58
      %p70 = scmp.eq.s32.totalorder %s27, 1
      %p71 = por %p69, %p70
      %p73 = scmp.ne.s32.totalorder %s58, %s72
      %p74 = scmp.eq.s32.totalorder %s27, 0
      %p75 = por %p73, %p74
      %s77 = sadd.s32 %s76, 1
      %p80 = scmp.eq.s32.totalorder %s21, 1
      %p81 = scmp.ne.s32.totalorder %s76, %s78
      %p82 = scmp.eq.s32.totalorder %s21, 0
      %p83 = por %p81, %p82
      %p84 = scmp.ne.s32.totalorder %s76, %s78
      %p85 = scmp.eq.s32.totalorder %s26, 1
      %p86 = por %p84, %p85
      %p87 = scmp.ne.s32.totalorder %s78, %s79
      %p88 = scmp.eq.s32.totalorder %s26, 0
      %p89 = por %p87, %p88
      %p90 = scmp.ne.s32.totalorder %s78, %s79
      %p91 = scmp.eq.s32.totalorder %s27, 1
      %p92 = por %p90, %p91
      %p94 = scmp.ne.s32.totalorder %s79, %s93
      %p95 = scmp.eq.s32.totalorder %s27, 0
      %p96 = por %p94, %p95
      %s98 = sadd.s32 %s97, 1
      %p101 = scmp.eq.s32.totalorder %s21, 1
      %p102 = scmp.ne.s32.totalorder %s97, %s99
      %p103 = scmp.eq.s32.totalorder %s21, 0
      %p104 = por %p102, %p103
      %p105 = scmp.ne.s32.totalorder %s97, %s99
      %p106 = scmp.eq.s32.totalorder %s26, 1
      %p107 = por %p105, %p106
      %p108 = scmp.ne.s32.totalorder %s99, %s100
      %p109 = scmp.eq.s32.totalorder %s26, 0
      %p110 = por %p108, %p109
      %p111 = scmp.ne.s32.totalorder %s99, %s100
      %p112 = scmp.eq.s32.totalorder %s27, 1
      %p113 = por %p111, %p112
      %p115 = scmp.ne.s32.totalorder %s100, %s114
      %p116 = scmp.eq.s32.totalorder %s27, 0
      %p117 = por %p115, %p116
      %s119 = sadd.s32 %s118, 1
      %p122 = scmp.eq.s32.totalorder %s21, 1
      %p123 = scmp.ne.s32.totalorder %s118, %s120
      %p124 = scmp.eq.s32.totalorder %s21, 0
      %p125 = por %p123, %p124
      %p126 = scmp.ne.s32.totalorder %s118, %s120
      %p127 = scmp.eq.s32.totalorder %s26, 1
      %p128 = por %p126, %p127
      %p129 = scmp.ne.s32.totalorder %s120, %s121
      %p130 = scmp.eq.s32.totalorder %s26, 0
      %p131 = por %p129, %p130
      %p132 = scmp.ne.s32.totalorder %s120, %s121
      %p133 = scmp.eq.s32.totalorder %s27, 1
      %p134 = por %p132, %p133
      %p136 = scmp.ne.s32.totalorder %s121, %s135
      %p137 = scmp.eq.s32.totalorder %s27, 0
      %p138 = por %p136, %p137
      %s140 = sadd.s32 %s139, 1
      %p143 = scmp.eq.s32.totalorder %s21, 1
      %p144 = scmp.ne.s32.totalorder %s139, %s141
      %p145 = scmp.eq.s32.totalorder %s21, 0
      %p146 = por %p144, %p145
      %p147 = scmp.ne.s32.totalorder %s139, %s141
      %p148 = scmp.eq.s32.totalorder %s26, 1
      %p149 = por %p147, %p148
      %p150 = scmp.ne.s32.totalorder %s141, %s142
      %p151 = scmp.eq.s32.totalorder %s26, 0
      %p152 = por %p150, %p151
      %p153 = scmp.ne.s32.totalorder %s141, %s142
      %p154 = scmp.eq.s32.totalorder %s27, 1
      %p155 = por %p153, %p154
      %p157 = scmp.ne.s32.totalorder %s142, %s156
      %p158 = scmp.eq.s32.totalorder %s27, 0
      %p159 = por %p157, %p158
      %s161 = sadd.s32 %s160, 1
      %p164 = scmp.eq.s32.totalorder %s21, 1
      %p165 = scmp.ne.s32.totalorder %s160, %s162
      %p166 = scmp.eq.s32.totalorder %s21, 0
      %p167 = por %p165, %p166
      %p168 = scmp.ne.s32.totalorder %s160, %s162
      %p169 = scmp.eq.s32.totalorder %s26, 1
      %p170 = por %p168, %p169
      %p171 = scmp.ne.s32.totalorder %s162, %s163
      %p172 = scmp.eq.s32.totalorder %s26, 0
      %p173 = por %p171, %p172
      %p174 = scmp.ne.s32.totalorder %s162, %s163
      %p175 = scmp.eq.s32.totalorder %s27, 1
      %p176 = por %p174, %p175
      %p178 = scmp.ne.s32.totalorder %s163, %s177
      %p179 = scmp.eq.s32.totalorder %s27, 0
      %p180 = por %p178, %p179
      %s182 = sadd.s32 %s181, 1
      %p185 = scmp.eq.s32.totalorder %s21, 1
      %p186 = scmp.ne.s32.totalorder %s181, %s183
      %p187 = scmp.eq.s32.totalorder %s21, 0
      %p188 = por %p186, %p187
      %p189 = scmp.ne.s32.totalorder %s181, %s183
      %p190 = scmp.eq.s32.totalorder %s26, 1
      %p191 = por %p189, %p190
      %p192 = scmp.ne.s32.totalorder %s183, %s184
      %p193 = scmp.eq.s32.totalorder %s26, 0
      %p194 = por %p192, %p193
      %p195 = scmp.ne.s32.totalorder %s183, %s184
      %p196 = scmp.eq.s32.totalorder %s27, 1
      %p197 = por %p195, %p196
      %p199 = scmp.ne.s32.totalorder %s184, %s198
      %p200 = scmp.eq.s32.totalorder %s27, 0
      %p201 = por %p199, %p200
      %s202 = ssub.s32 %s21, %s28
      %p203 = scmp.eq.s32.totalorder %s202, 0
      %s205 = sadd.s32 %s204, 1
      %s206 = scalar_select %p203, %s204, %s205
      %p209 = pneg %p203
      %p210 = scmp.eq.s32.totalorder %s21, 1
      %p211 = por %p209, %p210
      %p212 = scmp.ne.s32.totalorder %s204, %s207
      %p213 = scmp.eq.s32.totalorder %s21, 0
      %p214 = por %p212, %p213
      %p215 = scmp.ne.s32.totalorder %s204, %s207
      %p216 = scmp.eq.s32.totalorder %s26, 1
      %p217 = por %p215, %p216
      %p218 = scmp.ne.s32.totalorder %s207, %s208
      %p219 = scmp.eq.s32.totalorder %s26, 0
      %p220 = por %p218, %p219
      %p221 = scmp.ne.s32.totalorder %s207, %s208
      %p222 = scmp.eq.s32.totalorder %s27, 1
      %p223 = por %p221, %p222
      %p225 = scmp.ne.s32.totalorder %s208, %s224
      %p226 = scmp.eq.s32.totalorder %s27, 0
      %p227 = por %p225, %p226
      %p228 = scmp.le.s32.totalorder 1, %s21
      %p229 = scmp.lt.s32.totalorder %s21, 3
      %p230 = pnand %p228, %p229
      %p231 = pneg %p230
      // Predicated region
      $region9: #{tpu_custom_call.1} parent=5 // pred_check
        _
      $region10: #{tpu_custom_call.1} parent=5 // pred_check_branch
        %233 = sbr.rel (%p230) target = $region12
      $region11: #{tpu_custom_call.1} parent=5 // pred_region
        %s234 = ssub.s32 %s21, 1
        // Predicated region
        $region13: #{tpu_custom_call.1} parent=11 // pred_check
          %p235 = pneg %p68
        $region14: #{tpu_custom_call.1} parent=11 // pred_check_branch
          %237 = sbr.rel (%p235) target = $region16
        $region15: #{tpu_custom_call.1} parent=11 // pred_region
          _
        $region16: #{tpu_custom_call.1} parent=11 // pred_fallthru
          _
        // Predicated region
        $region17: #{tpu_custom_call.1} parent=11 // pred_check
          %p238 = pneg %p89
        $region18: #{tpu_custom_call.1} parent=11 // pred_check_branch
          %240 = sbr.rel (%p238) target = $region20
        $region19: #{tpu_custom_call.1} parent=11 // pred_region
          _
        $region20: #{tpu_custom_call.1} parent=11 // pred_fallthru
          _
        // Predicated region
        $region21: #{tpu_custom_call.1} parent=11 // pred_check
          %p241 = pneg %p110
        $region22: #{tpu_custom_call.1} parent=11 // pred_check_branch
          %243 = sbr.rel (%p241) target = $region24
        $region23: #{tpu_custom_call.1} parent=11 // pred_region
          _
        $region24: #{tpu_custom_call.1} parent=11 // pred_fallthru
          _
        // Predicated region
        $region25: #{tpu_custom_call.1} parent=11 // pred_check
          %p244 = pneg %p131
        $region26: #{tpu_custom_call.1} parent=11 // pred_check_branch
          %246 = sbr.rel (%p244) target = $region28
        $region27: #{tpu_custom_call.1} parent=11 // pred_region
          _
        $region28: #{tpu_custom_call.1} parent=11 // pred_fallthru
          _
        // Predicated region
        $region29: #{tpu_custom_call.1} parent=11 // pred_check
          %p247 = pneg %p152
        $region30: #{tpu_custom_call.1} parent=11 // pred_check_branch
          %249 = sbr.rel (%p247) target = $region32
        $region31: #{tpu_custom_call.1} parent=11 // pred_region
          _
        $region32: #{tpu_custom_call.1} parent=11 // pred_fallthru
          _
        // Predicated region
        $region33: #{tpu_custom_call.1} parent=11 // pred_check
          %p250 = pneg %p173
        $region34: #{tpu_custom_call.1} parent=11 // pred_check_branch
          %252 = sbr.rel (%p250) target = $region36
        $region35: #{tpu_custom_call.1} parent=11 // pred_region
          _
        $region36: #{tpu_custom_call.1} parent=11 // pred_fallthru
          _
        // Predicated region
        $region37: #{tpu_custom_call.1} parent=11 // pred_check
          %p253 = pneg %p194
        $region38: #{tpu_custom_call.1} parent=11 // pred_check_branch
          %255 = sbr.rel (%p253) target = $region40
        $region39: #{tpu_custom_call.1} parent=11 // pred_region
          %257 = vsyncadd [#allocation8], 0
          %s258 = sshll.u32 %s7, 4
          %s259 = int_to_ptr.hbm [resolvable:$true] %s258
          %s260 = sshll.u32 [#allocation7], 4
          %s261 = int_to_ptr.vmem [resolvable:$true] %s260
          %266 = dma.hbm_to_vmem [thread:$0]  %s259, 256, %s261, [#allocation8], 128, 128, 8
        $region40: #{tpu_custom_call.1} parent=11 // pred_fallthru
          _
      $region12: #{tpu_custom_call.1} parent=5 // pred_fallthru
        _
      %p267 = scmp.lt.s32.totalorder %s21, 2
      // Predicated region
      $region41: #{tpu_custom_call.1} parent=5 // pred_check
        %p268 = pneg %p267
      $region42: #{tpu_custom_call.1} parent=5 // pred_check_branch
        %270 = sbr.rel (%p268) target = $region44
      $region43: #{tpu_custom_call.1} parent=5 // pred_region
        // Predicated region
        $region45: #{tpu_custom_call.1} parent=43 // pred_check
          %p271 = pneg %p41
        $region46: #{tpu_custom_call.1} parent=43 // pred_check_branch
          %273 = sbr.rel (%p271) target = $region48
        $region47: #{tpu_custom_call.1} parent=43 // pred_region
          %s274 = sand.u32 %s31, 1
          %s275 = scalar_lea.sflag [#allocation5], %s274
          %s276 = sand.u32 %s31, 1
          %s277 = smul.addr %s276, 48
          %s278 = scalar_lea.vmem [#allocation4], %s277
          %280 = vsyncadd %s275, 0
          %s281 = smul.addr %s21, 6
          %s282 = smul.addr %s281, 8
          %s283 = scalar_lea.hbm %s0, %s282
          %s284 = sshll.u32 %s283, 4
          %s285 = int_to_ptr.hbm [resolvable:$true] %s284
          %s286 = sshll.u32 %s278, 4
          %s287 = int_to_ptr.vmem [resolvable:$true] %s286
          %292 = dma.hbm_to_vmem [thread:$0]  %s285, 768, %s287, %s275, 384, 384, 24
        $region48: #{tpu_custom_call.1} parent=43 // pred_fallthru
          _
      $region44: #{tpu_custom_call.1} parent=5 // pred_fallthru
        _
      %p293 = scmp.le.s32.totalorder 1, %s21
      %p294 = scmp.lt.s32.totalorder %s21, 3
      %p295 = pnand %p293, %p294
      %p296 = pneg %p295
      // Predicated region
      $region49: #{tpu_custom_call.1} parent=5 // pred_check
        _
      $region50: #{tpu_custom_call.1} parent=5 // pred_check_branch
        %298 = sbr.rel (%p295) target = $region52
      $region51: #{tpu_custom_call.1} parent=5 // pred_region
        %s299 = ssub.s32 %s21, 1
        %s300 = sand.u32 %s34, 1
        %s301 = scalar_lea.sflag [#allocation5], %s300
        %s302 = sand.u32 %s34, 1
        %s303 = smul.addr %s302, 48
        %s304 = scalar_lea.vmem [#allocation4], %s303
        // Predicated region
        $region53: #{tpu_custom_call.1} parent=51 // pred_check
          %p305 = pneg %p47
        $region54: #{tpu_custom_call.1} parent=51 // pred_check_branch
          %307 = sbr.rel (%p305) target = $region56
        $region55: #{tpu_custom_call.1} parent=51 // pred_region
          %309 = dma.done %s301, 768
        $region56: #{tpu_custom_call.1} parent=51 // pred_fallthru
          _
        // Predicated region
        $region57: #{tpu_custom_call.1} parent=51 // pred_check
          %p310 = pneg %p194
        $region58: #{tpu_custom_call.1} parent=51 // pred_check_branch
          %312 = sbr.rel (%p310) target = $region60
        $region59: #{tpu_custom_call.1} parent=51 // pred_region
          %314 = dma.done [#allocation8], 256
        $region60: #{tpu_custom_call.1} parent=51 // pred_fallthru
          _
        %s315 = sand.u32 %s34, 1
        %s316 = scalar_lea.sflag [#allocation5], %s315
        %s317 = sand.u32 %s34, 1
        %s318 = smul.addr %s317, 48
        %s319 = scalar_lea.vmem [#allocation4], %s318
        %p320 = pneg %p47
        %p321 = pneg %p44
        %p322 = pneg %p68
        %p323 = pneg %p65
        %p324 = pneg %p89
        %p325 = pneg %p86
        %p326 = pneg %p110
        %p327 = pneg %p107
        %p328 = pneg %p131
        %p329 = pneg %p128
        %p330 = pneg %p152
        %p331 = pneg %p149
        %p332 = pneg %p173
        %p333 = pneg %p170
        %p334 = pneg %p194
        %p335 = pneg %p191
        %p336 = pneg %p220
        %p337 = pneg %p217
        %s338 = sand.u32 %s207, 1
        %s339 = scalar_lea.sflag [#allocation6], %s338
        %s340 = sand.u32 %s207, 1
        %s341 = smul.addr %s340, 16
        %s342 = scalar_lea.vmem [#allocation9], %s341
        %v344 = vld [vmem:[%s304] sm:$0xff]
        %v345 = vld [vmem:[%s304 + $0x8] sm:$0xff]
        %v346 = vld [vmem:[%s304 + $0x10] sm:$0xff]
        %v347 = vld [vmem:[%s304 + $0x18] sm:$0xff]
        %v348 = vld [vmem:[%s304 + $0x20] sm:$0xff]
        %v349 = vld [vmem:[%s304 + $0x28] sm:$0xff]
        %v350 = vld [vmem:[%s1] sm:$0xff]
        %v351 = vld [vmem:[%s1 + $0x8] sm:$0xff]
        %v352 = vld [vmem:[%s2] sm:$0xff]
        %v353 = vld [vmem:[%s2 + $0x8] sm:$0xff]
        %354 = vrot.lane.b32.xlu0 %v344, 19
        %v355 = vpop.permute.xlu0 %354
        %356 = vrot.lane.b32.xlu0 %v347, 19
        %v357 = vpop.permute.xlu0 %356
        %358 = vrot.lane.b32.xlu0 %v345, 19
        %v359 = vpop.permute.xlu0 %358
        %360 = vrot.lane.b32.xlu0 %v348, 19
        %v361 = vpop.permute.xlu0 %360
        %362 = vrot.lane.b32.xlu0 %v346, 19
        %v363 = vpop.permute.xlu0 %362
        %364 = vrot.lane.b32.xlu0 %v349, 19
        %v365 = vpop.permute.xlu0 %364
        %v366 = vlaneseq
        %v367 = vand.u32 %v366, 127
        %vm368 = vcmp.lt.s32.totalorder %v367, 19
        %v369 = vsel %vm368, %v359, %v363
        %v370 = vsel %vm368, %v361, %v365
        %v371 = vsel %vm368, %v355, %v359
        %v372 = vsel %vm368, %v357, %v361
        %v373 = vsel %vm368, %v363, %v355
        %v374 = vsel %vm368, %v365, %v357
        %v375 = vpack.c.bf16 %v371, %v373
        %v376 = vpack.c.bf16 %v369, %v369
        %v377 = vpack.c.bf16 %v372, %v374
        %v378 = vpack.c.bf16 %v370, %v370
        %379 = vst [vmem:[#allocation2] sm:$0xff] %v375
        %380 = vst [vmem:[#allocation2 + $0x8] sm:$0xf] %v376
        %381 = vst [vmem:[#allocation2 + $0xc] sm:$0xff] %v377
        %382 = vst [vmem:[#allocation2 + $0x14] sm:$0xf] %v378
        %383 = vrot.lane.b32.xlu0 %v344, 18
        %v384 = vpop.permute.xlu0 %383
        %385 = vrot.lane.b32.xlu0 %v347, 18
        %v386 = vpop.permute.xlu0 %385
        %387 = vrot.lane.b32.xlu0 %v345, 18
        %v388 = vpop.permute.xlu0 %387
        %389 = vrot.lane.b32.xlu0 %v348, 18
        %v390 = vpop.permute.xlu0 %389
        %391 = vrot.lane.b32.xlu0 %v346, 18
        %v392 = vpop.permute.xlu0 %391
        %393 = vrot.lane.b32.xlu0 %v349, 18
        %v394 = vpop.permute.xlu0 %393
        %vm395 = vcmp.lt.s32.totalorder %v367, 18
        %v396 = vsel %vm395, %v388, %v392
        %v397 = vsel %vm395, %v390, %v394
        %v398 = vsel %vm395, %v384, %v388
        %v399 = vsel %vm395, %v386, %v390
        %v400 = vsel %vm395, %v392, %v384
        %v401 = vsel %vm395, %v394, %v386
        %v402 = vpack.c.bf16 %v398, %v400
        %v403 = vpack.c.bf16 %v396, %v396
        %v404 = vpack.c.bf16 %v399, %v401
        %v405 = vpack.c.bf16 %v397, %v397
        %406 = vst [vmem:[#allocation2 + $0x18] sm:$0xff] %v402
        %407 = vst [vmem:[#allocation2 + $0x20] sm:$0xf] %v403
        %408 = vst [vmem:[#allocation2 + $0x24] sm:$0xff] %v404
        %409 = vst [vmem:[#allocation2 + $0x2c] sm:$0xf] %v405
        %410 = vrot.lane.b32.xlu0 %v344, 17
        %v411 = vpop.permute.xlu0 %410
        %412 = vrot.lane.b32.xlu0 %v347, 17
        %v413 = vpop.permute.xlu0 %412
        %414 = vrot.lane.b32.xlu0 %v345, 17
        %v415 = vpop.permute.xlu0 %414
        %416 = vrot.lane.b32.xlu0 %v348, 17
        %v417 = vpop.permute.xlu0 %416
        %418 = vrot.lane.b32.xlu0 %v346, 17
        %v419 = vpop.permute.xlu0 %418
        %420 = vrot.lane.b32.xlu0 %v349, 17
        %v421 = vpop.permute.xlu0 %420
        %vm422 = vcmp.lt.s32.totalorder %v367, 17
        %v423 = vsel %vm422, %v415, %v419
        %v424 = vsel %vm422, %v417, %v421
        %v425 = vsel %vm422, %v411, %v415
        %v426 = vsel %vm422, %v413, %v417
        %v427 = vsel %vm422, %v419, %v411
        %v428 = vsel %vm422, %v421, %v413
        %v429 = vpack.c.bf16 %v425, %v427
        %v430 = vpack.c.bf16 %v423, %v423
        %v431 = vpack.c.bf16 %v426, %v428
        %v432 = vpack.c.bf16 %v424, %v424
        %433 = vst [vmem:[#allocation2 + $0x30] sm:$0xff] %v429
        %434 = vst [vmem:[#allocation2 + $0x38] sm:$0xf] %v430
        %435 = vst [vmem:[#allocation2 + $0x3c] sm:$0xff] %v431
        %436 = vst [vmem:[#allocation2 + $0x44] sm:$0xf] %v432
        %437 = vrot.lane.b32.xlu0 %v344, 1
        %v438 = vpop.permute.xlu0 %437
        %439 = vrot.lane.b32.xlu0 %v347, 1
        %v440 = vpop.permute.xlu0 %439
        %441 = vrot.lane.b32.xlu0 %v345, 1
        %v442 = vpop.permute.xlu0 %441
        %443 = vrot.lane.b32.xlu0 %v348, 1
        %v444 = vpop.permute.xlu0 %443
        %445 = vrot.lane.b32.xlu0 %v346, 1
        %v446 = vpop.permute.xlu0 %445
        %447 = vrot.lane.b32.xlu0 %v349, 1
        %v448 = vpop.permute.xlu0 %447
        %vm449 = vcmp.lt.s32.totalorder %v367, 1
        %v450 = vsel %vm449, %v442, %v446
        %v451 = vsel %vm449, %v444, %v448
        %v452 = vsel %vm449, %v438, %v442
        %v453 = vsel %vm449, %v440, %v444
        %v454 = vsel %vm449, %v446, %v438
        %v455 = vsel %vm449, %v448, %v440
        %v456 = vpack.c.bf16 %v452, %v454
        %v457 = vpack.c.bf16 %v450, %v450
        %v458 = vpack.c.bf16 %v453, %v455
        %v459 = vpack.c.bf16 %v451, %v451
        %460 = vst [vmem:[#allocation2 + $0x48] sm:$0xff] %v456
        %461 = vst [vmem:[#allocation2 + $0x50] sm:$0xf] %v457
        %462 = vst [vmem:[#allocation2 + $0x54] sm:$0xff] %v458
        %463 = vst [vmem:[#allocation2 + $0x5c] sm:$0xf] %v459
        %v464 = vpack.c.bf16 %v345, %v344
        %v465 = vpack.c.bf16 %v346, %v346
        %v466 = vpack.c.bf16 %v348, %v347
        %v467 = vpack.c.bf16 %v349, %v349
        %468 = vst [vmem:[#allocation2 + $0x60] sm:$0xff] %v464
        %469 = vst [vmem:[#allocation2 + $0x68] sm:$0xf] %v465
        %470 = vst [vmem:[#allocation2 + $0x6c] sm:$0xff] %v466
        %471 = vst [vmem:[#allocation2 + $0x74] sm:$0xf] %v467
        %472 = vrot.lane.b32.xlu0 %v344, 127
        %v473 = vpop.permute.xlu0 %472
        %474 = vrot.lane.b32.xlu0 %v347, 127
        %v475 = vpop.permute.xlu0 %474
        %476 = vrot.lane.b32.xlu0 %v345, 127
        %v477 = vpop.permute.xlu0 %476
        %478 = vrot.lane.b32.xlu0 %v348, 127
        %v479 = vpop.permute.xlu0 %478
        %480 = vrot.lane.b32.xlu0 %v346, 127
        %v481 = vpop.permute.xlu0 %480
        %482 = vrot.lane.b32.xlu0 %v349, 127
        %v483 = vpop.permute.xlu0 %482
        %vm484 = vcmp.lt.s32.totalorder %v367, 127
        %v485 = vsel %vm484, %v477, %v481
        %v486 = vsel %vm484, %v479, %v483
        %v487 = vsel %vm484, %v473, %v477
        %v488 = vsel %vm484, %v475, %v479
        %v489 = vsel %vm484, %v481, %v473
        %v490 = vsel %vm484, %v483, %v475
        %v491 = vpack.c.bf16 %v485, %v487
        %v492 = vpack.c.bf16 %v489, %v489
        %v493 = vpack.c.bf16 %v486, %v488
        %v494 = vpack.c.bf16 %v490, %v490
        %495 = vst [vmem:[#allocation2 + $0x78] sm:$0xff] %v491
        %496 = vst [vmem:[#allocation2 + $0x80] sm:$0xf] %v492
        %497 = vst [vmem:[#allocation2 + $0x84] sm:$0xff] %v493
        %498 = vst [vmem:[#allocation2 + $0x8c] sm:$0xf] %v494
        %499 = vrot.lane.b32.xlu0 %v344, 111
        %v500 = vpop.permute.xlu0 %499
        %501 = vrot.lane.b32.xlu0 %v347, 111
        %v502 = vpop.permute.xlu0 %501
        %503 = vrot.lane.b32.xlu0 %v345, 111
        %v504 = vpop.permute.xlu0 %503
        %505 = vrot.lane.b32.xlu0 %v348, 111
        %v506 = vpop.permute.xlu0 %505
        %507 = vrot.lane.b32.xlu0 %v346, 111
        %v508 = vpop.permute.xlu0 %507
        %509 = vrot.lane.b32.xlu0 %v349, 111
        %v510 = vpop.permute.xlu0 %509
        %vm511 = vcmp.lt.s32.totalorder %v367, 111
        %v512 = vsel %vm511, %v504, %v508
        %v513 = vsel %vm511, %v506, %v510
        %v514 = vsel %vm511, %v500, %v504
        %v515 = vsel %vm511, %v502, %v506
        %v516 = vsel %vm511, %v508, %v500
        %v517 = vsel %vm511, %v510, %v502
        %v518 = vpack.c.bf16 %v512, %v514
        %v519 = vpack.c.bf16 %v516, %v516
        %v520 = vpack.c.bf16 %v513, %v515
        %v521 = vpack.c.bf16 %v517, %v517
        %522 = vst [vmem:[#allocation2 + $0x90] sm:$0xff] %v518
        %523 = vst [vmem:[#allocation2 + $0x98] sm:$0xf] %v519
        %524 = vst [vmem:[#allocation2 + $0x9c] sm:$0xff] %v520
        %525 = vst [vmem:[#allocation2 + $0xa4] sm:$0xf] %v521
        %526 = vrot.lane.b32.xlu0 %v344, 110
        %v527 = vpop.permute.xlu0 %526
        %528 = vrot.lane.b32.xlu0 %v347, 110
        %v529 = vpop.permute.xlu0 %528
        %530 = vrot.lane.b32.xlu0 %v345, 110
        %v531 = vpop.permute.xlu0 %530
        %532 = vrot.lane.b32.xlu0 %v348, 110
        %v533 = vpop.permute.xlu0 %532
        %534 = vrot.lane.b32.xlu0 %v346, 110
        %v535 = vpop.permute.xlu0 %534
        %536 = vrot.lane.b32.xlu0 %v349, 110
        %v537 = vpop.permute.xlu0 %536
        %vm538 = vcmp.lt.s32.totalorder %v367, 110
        %v539 = vsel %vm538, %v531, %v535
        %v540 = vsel %vm538, %v533, %v537
        %v541 = vsel %vm538, %v527, %v531
        %v542 = vsel %vm538, %v529, %v533
        %v543 = vsel %vm538, %v535, %v527
        %v544 = vsel %vm538, %v537, %v529
        %v545 = vpack.c.bf16 %v539, %v541
        %v546 = vpack.c.bf16 %v543, %v543
        %v547 = vpack.c.bf16 %v540, %v542
        %v548 = vpack.c.bf16 %v544, %v544
        %549 = vst [vmem:[#allocation2 + $0xa8] sm:$0xff] %v545
        %550 = vst [vmem:[#allocation2 + $0xb0] sm:$0xf] %v546
        %551 = vst [vmem:[#allocation2 + $0xb4] sm:$0xff] %v547
        %552 = vst [vmem:[#allocation2 + $0xbc] sm:$0xf] %v548
        %553 = vrot.lane.b32.xlu0 %v344, 109
        %v554 = vpop.permute.xlu0 %553
        %555 = vrot.lane.b32.xlu0 %v347, 109
        %v556 = vpop.permute.xlu0 %555
        %557 = vrot.lane.b32.xlu0 %v345, 109
        %v558 = vpop.permute.xlu0 %557
        %559 = vrot.lane.b32.xlu0 %v348, 109
        %v560 = vpop.permute.xlu0 %559
        %561 = vrot.lane.b32.xlu0 %v346, 109
        %v562 = vpop.permute.xlu0 %561
        %563 = vrot.lane.b32.xlu0 %v349, 109
        %v564 = vpop.permute.xlu0 %563
        %vm565 = vcmp.lt.s32.totalorder %v367, 109
        %v566 = vsel %vm565, %v558, %v562
        %v567 = vsel %vm565, %v560, %v564
        %v568 = vsel %vm565, %v554, %v558
        %v569 = vsel %vm565, %v556, %v560
        %v570 = vsel %vm565, %v562, %v554
        %v571 = vsel %vm565, %v564, %v556
        %v572 = vpack.c.bf16 %v566, %v568
        %v573 = vpack.c.bf16 %v570, %v570
        %v574 = vpack.c.bf16 %v567, %v569
        %v575 = vpack.c.bf16 %v571, %v571
        %576 = vst [vmem:[#allocation2 + $0xc0] sm:$0xff] %v572
        %577 = vst [vmem:[#allocation2 + $0xc8] sm:$0xf] %v573
        %578 = vst [vmem:[#allocation2 + $0xcc] sm:$0xff] %v574
        %579 = vst [vmem:[#allocation2 + $0xd4] sm:$0xf] %v575
        %v580 = vld [vmem:[#allocation2] sm:$0xff]
        %v581 = vld [vmem:[#allocation2 + $0x8] sm:$0xf]
        %v582 = vld [vmem:[#allocation2 + $0xc] sm:$0xff]
        %v583 = vld [vmem:[#allocation2 + $0x14] sm:$0xf]
        %v584 = vld [vmem:[#allocation2 + $0x18] sm:$0xff]
        %v585 = vld [vmem:[#allocation2 + $0x20] sm:$0xf]
        %v586 = vld [vmem:[#allocation2 + $0x24] sm:$0xff]
        %v587 = vld [vmem:[#allocation2 + $0x2c] sm:$0xf]
        %v588 = vld [vmem:[#allocation2 + $0x30] sm:$0xff]
        %v589 = vld [vmem:[#allocation2 + $0x38] sm:$0xf]
        %v590 = vld [vmem:[#allocation2 + $0x3c] sm:$0xff]
        %v591 = vld [vmem:[#allocation2 + $0x44] sm:$0xf]
        %v592 = vld [vmem:[#allocation2 + $0x48] sm:$0xff]
        %v593 = vld [vmem:[#allocation2 + $0x50] sm:$0xf]
        %v594 = vld [vmem:[#allocation2 + $0x54] sm:$0xff]
        %v595 = vld [vmem:[#allocation2 + $0x5c] sm:$0xf]
        %v596 = vld [vmem:[#allocation2 + $0x60] sm:$0xff]
        %v597 = vld [vmem:[#allocation2 + $0x68] sm:$0xf]
        %v598 = vld [vmem:[#allocation2 + $0x6c] sm:$0xff]
        %v599 = vld [vmem:[#allocation2 + $0x74] sm:$0xf]
        %v600 = vld [vmem:[#allocation2 + $0x78] sm:$0xff]
        %v601 = vld [vmem:[#allocation2 + $0x80] sm:$0xf]
        %v602 = vld [vmem:[#allocation2 + $0x84] sm:$0xff]
        %v603 = vld [vmem:[#allocation2 + $0x8c] sm:$0xf]
        %v604 = vld [vmem:[#allocation2 + $0x90] sm:$0xff]
        %v605 = vld [vmem:[#allocation2 + $0x98] sm:$0xf]
        %v606 = vld [vmem:[#allocation2 + $0x9c] sm:$0xff]
        %v607 = vld [vmem:[#allocation2 + $0xa4] sm:$0xf]
        %v608 = vld [vmem:[#allocation2 + $0xa8] sm:$0xff]
        %v609 = vld [vmem:[#allocation2 + $0xb0] sm:$0xf]
        %v610 = vld [vmem:[#allocation2 + $0xb4] sm:$0xff]
        %v611 = vld [vmem:[#allocation2 + $0xbc] sm:$0xf]
        %v612 = vld [vmem:[#allocation2 + $0xc0] sm:$0xff]
        %v613 = vld [vmem:[#allocation2 + $0xc8] sm:$0xf]
        %v614 = vld [vmem:[#allocation2 + $0xcc] sm:$0xff]
        %v615 = vld [vmem:[#allocation2 + $0xd4] sm:$0xf]
        %617 = vset.pattern.permute.xlu0 0
        %618 = vperm.xlu0 %617, %v352
        %v619 = vpop.permute.xlu0 %618
        %622 = vset.pattern.permute.xlu0 0
        %623 = vperm.xlu0 %622, %v353
        %v624 = vpop.permute.xlu0 %623
        %v628 = vunpack.c.l.b16 %v350
        %v629 = vunpack.c.h.b16 %v350
        %v630 = vunpack.c.l.b16 %v351
        %v631 = vunpack.c.h.b16 %v351
        %v632 = vpack.c.b16 %v630, %v628
        %v633 = vpack.c.b16 %v631, %v629
        %v671 = vunpack.c.l.b16 %v580
        %v672 = vunpack.c.h.b16 %v580
        %v673 = vunpack.c.l.b16 %v581
        %v674 = vunpack.c.l.b16 %v582
        %v675 = vunpack.c.h.b16 %v582
        %v676 = vunpack.c.l.b16 %v583
        %v677 = vunpack.c.l.b16 %v584
        %v678 = vunpack.c.h.b16 %v584
        %v679 = vunpack.c.l.b16 %v585
        %v680 = vunpack.c.l.b16 %v586
        %v681 = vunpack.c.h.b16 %v586
        %v682 = vunpack.c.l.b16 %v587
        %v683 = vunpack.c.l.b16 %v588
        %v684 = vunpack.c.h.b16 %v588
        %v685 = vunpack.c.l.b16 %v589
        %v686 = vunpack.c.l.b16 %v590
        %v687 = vunpack.c.h.b16 %v590
        %v688 = vunpack.c.l.b16 %v591
        %v689 = vunpack.c.l.b16 %v592
        %v690 = vunpack.c.h.b16 %v592
        %v691 = vunpack.c.l.b16 %v593
        %v692 = vunpack.c.l.b16 %v594
        %v693 = vunpack.c.h.b16 %v594
        %v694 = vunpack.c.l.b16 %v595
        %v695 = vunpack.c.l.b16 %v596
        %v696 = vunpack.c.h.b16 %v596
        %v697 = vunpack.c.l.b16 %v597
        %v698 = vunpack.c.l.b16 %v598
        %v699 = vunpack.c.h.b16 %v598
        %v700 = vunpack.c.l.b16 %v599
        %v701 = vunpack.c.l.b16 %v600
        %v702 = vunpack.c.h.b16 %v600
        %v703 = vunpack.c.l.b16 %v601
        %v704 = vunpack.c.l.b16 %v602
        %v705 = vunpack.c.h.b16 %v602
        %v706 = vunpack.c.l.b16 %v603
        %v707 = vunpack.c.l.b16 %v604
        %v708 = vunpack.c.h.b16 %v604
        %v709 = vunpack.c.l.b16 %v605
        %v710 = vunpack.c.l.b16 %v606
        %v711 = vunpack.c.h.b16 %v606
        %v712 = vunpack.c.l.b16 %v607
        %v713 = vunpack.c.l.b16 %v608
        %v714 = vunpack.c.h.b16 %v608
        %v715 = vunpack.c.l.b16 %v609
        %v716 = vunpack.c.l.b16 %v610
        %v717 = vunpack.c.h.b16 %v610
        %v718 = vunpack.c.l.b16 %v611
        %v719 = vunpack.c.l.b16 %v612
        %v720 = vunpack.c.h.b16 %v612
        %v721 = vunpack.c.l.b16 %v613
        %v722 = vunpack.c.l.b16 %v614
        %v723 = vunpack.c.h.b16 %v614
        %v724 = vunpack.c.l.b16 %v615
        %v725 = vpack.c.b16 %v674, %v671
        %v726 = vpack.c.b16 %v675, %v672
        %v727 = vpack.c.b16 %v676, %v673
        %v728 = vpack.c.b16 %v680, %v677
        %v729 = vpack.c.b16 %v681, %v678
        %v730 = vpack.c.b16 %v682, %v679
        %v731 = vpack.c.b16 %v686, %v683
        %v732 = vpack.c.b16 %v687, %v684
        %v733 = vpack.c.b16 %v688, %v685
        %v734 = vpack.c.b16 %v692, %v689
        %v735 = vpack.c.b16 %v693, %v690
        %v736 = vpack.c.b16 %v694, %v691
        %v737 = vpack.c.b16 %v698, %v695
        %v738 = vpack.c.b16 %v699, %v696
        %v739 = vpack.c.b16 %v700, %v697
        %v740 = vpack.c.b16 %v704, %v701
        %v741 = vpack.c.b16 %v705, %v702
        %v742 = vpack.c.b16 %v706, %v703
        %v743 = vpack.c.b16 %v710, %v707
        %v744 = vpack.c.b16 %v711, %v708
        %v745 = vpack.c.b16 %v712, %v709
        %v746 = vpack.c.b16 %v716, %v713
        %v747 = vpack.c.b16 %v717, %v714
        %v748 = vpack.c.b16 %v718, %v715
        %v749 = vpack.c.b16 %v722, %v719
        %v750 = vpack.c.b16 %v723, %v720
        %v751 = vpack.c.b16 %v724, %v721
        %vm779 = vcmask 130048
        %v781 = vsel %vm779, %v633, 0
        %783 = vmatpush.bf16.msra.mxu0 %v746
        %784 = vmatpush.bf16.msra.mxu0 %v743
        %785 = vmatpush.bf16.msra.mxu0 %v740
        %786 = vmatpush.bf16.msra.mxu0 %v737
        %787 = vmatpush.bf16.msra.mxu0 %v734
        %788 = vmatpush.bf16.msra.mxu0 %v731
        %789 = vmatpush.bf16.msra.mxu0 %v728
        %790 = vmatpush.bf16.msra.mxu0 %v725
        %791 = vmatmul.bf16.gmra.mxu0 %v632
        %v792 = vpop.f32.mrf.mxu0
        %v793 = vadd.f32 %v619, %v792
        %v794 = vpop.f32.mrf.mxu0
        %v795 = vadd.f32 %v624, %v794
        %796 = vdwg.mxu0
        %797 = vmatpush.bf16.msra.mxu0 0
        %798 = vmatpush.bf16.msra.mxu0 0
        %799 = vmatpush.bf16.msra.mxu0 0
        %800 = vmatpush.bf16.msra.mxu0 0
        %801 = vmatpush.bf16.msra.mxu0 0
        %802 = vmatpush.bf16.msra.mxu0 0
        %803 = vmatpush.bf16.msra.mxu0 0
        %804 = vmatpush.bf16.msra.mxu0 %v749
        %805 = vmatmul.bf16.gmra.mxu0 %v781
        %v806 = vpop.f32.mrf.mxu0
        %v807 = vadd.f32 %v793, %v806
        %v808 = vpop.f32.mrf.mxu0
        %v809 = vadd.f32 %v795, %v808
        %810 = vdwg.mxu0
        %811 = vmatpush.bf16.msra.mxu0 %v747
        %812 = vmatpush.bf16.msra.mxu0 %v744
        %813 = vmatpush.bf16.msra.mxu0 %v741
        %814 = vmatpush.bf16.msra.mxu0 %v738
        %815 = vmatpush.bf16.msra.mxu0 %v735
        %816 = vmatpush.bf16.msra.mxu0 %v732
        %817 = vmatpush.bf16.msra.mxu0 %v729
        %818 = vmatpush.bf16.msra.mxu0 %v726
        %819 = vmatmul.bf16.gmra.mxu0 %v632
        %v820 = vpop.f32.mrf.mxu0
        %v821 = vadd.f32 %v619, %v820
        %v822 = vpop.f32.mrf.mxu0
        %v823 = vadd.f32 %v624, %v822
        %824 = vdwg.mxu0
        %825 = vmatpush.bf16.msra.mxu0 0
        %826 = vmatpush.bf16.msra.mxu0 0
        %827 = vmatpush.bf16.msra.mxu0 0
        %828 = vmatpush.bf16.msra.mxu0 0
        %829 = vmatpush.bf16.msra.mxu0 0
        %830 = vmatpush.bf16.msra.mxu0 0
        %831 = vmatpush.bf16.msra.mxu0 0
        %832 = vmatpush.bf16.msra.mxu0 %v750
        %833 = vmatmul.bf16.gmra.mxu0 %v781
        %v834 = vpop.f32.mrf.mxu0
        %v835 = vadd.f32 %v821, %v834
        %v836 = vpop.f32.mrf.mxu0
        %v837 = vadd.f32 %v823, %v836
        %838 = vdwg.mxu0
        %839 = vmatpush.bf16.msra.mxu0 %v748
        %840 = vmatpush.bf16.msra.mxu0 %v745
        %841 = vmatpush.bf16.msra.mxu0 %v742
        %842 = vmatpush.bf16.msra.mxu0 %v739
        %843 = vmatpush.bf16.msra.mxu0 %v736
        %844 = vmatpush.bf16.msra.mxu0 %v733
        %845 = vmatpush.bf16.msra.mxu0 %v730
        %846 = vmatpush.bf16.msra.mxu0 %v727
        %847 = vmatmul.bf16.gmra.mxu0 %v632
        %v848 = vpop.f32.mrf.mxu0
        %v849 = vadd.f32 %v619, %v848
        %v850 = vpop.f32.mrf.mxu0
        %v851 = vadd.f32 %v624, %v850
        %852 = vdwg.mxu0
        %853 = vmatpush.bf16.msra.mxu0 0
        %854 = vmatpush.bf16.msra.mxu0 0
        %855 = vmatpush.bf16.msra.mxu0 0
        %856 = vmatpush.bf16.msra.mxu0 0
        %857 = vmatpush.bf16.msra.mxu0 0
        %858 = vmatpush.bf16.msra.mxu0 0
        %859 = vmatpush.bf16.msra.mxu0 0
        %860 = vmatpush.bf16.msra.mxu0 %v751
        %861 = vmatmul.bf16.gmra.mxu0 %v781
        %v862 = vpop.f32.mrf.mxu0
        %v863 = vadd.f32 %v849, %v862
        %v864 = vpop.f32.mrf.mxu0
        %v865 = vadd.f32 %v851, %v864
        %866 = vdwg.mxu0
        %v867 = vld [vmem:[%s5] sm:$0x7]
        %vm868 = vcmp.gt.f32.partialorder %v867, 0.0
        %v869 = vsel %vm868, 1, 0
        %v870 = vperm.slane %v869, 0
        %v871 = vperm.slane %v869, 1
        %v872 = vperm.slane %v869, 2
        %vm873 = vcmp.eq.s32.totalorder %v870, 1
        %vm874 = vcmp.eq.s32.totalorder %v871, 1
        %vm875 = vcmp.eq.s32.totalorder %v872, 1
        %v876 = vsel %vm873, %v807, -1e+30
        %v877 = vsel %vm874, %v835, -1e+30
        %v878 = vsel %vm875, %v863, -1e+30
        %v879 = vsel %vm873, %v809, -1e+30
        %v880 = vsel %vm874, %v837, -1e+30
        %v881 = vsel %vm875, %v865, -1e+30
        %882 = vrot.lane.b32.xlu0 %v876, 127
        %v883 = vpop.permute.xlu0 %882
        %884 = vrot.lane.b32.xlu0 %v879, 127
        %v885 = vpop.permute.xlu0 %884
        %886 = vrot.lane.b32.xlu0 %v877, 127
        %v887 = vpop.permute.xlu0 %886
        %888 = vrot.lane.b32.xlu0 %v880, 127
        %v889 = vpop.permute.xlu0 %888
        %890 = vrot.lane.b32.xlu0 %v878, 127
        %v891 = vpop.permute.xlu0 %890
        %892 = vrot.lane.b32.xlu0 %v881, 127
        %v893 = vpop.permute.xlu0 %892
        %v894 = vsel %vm484, %v887, %v891
        %v895 = vsel %vm484, %v889, %v893
        %v896 = vsel %vm484, %v883, %v887
        %v897 = vsel %vm484, %v885, %v889
        %v898 = vsel %vm484, %v891, %v883
        %v899 = vsel %vm484, %v893, %v885
        %v900 = vmax.f32 %v876, %v896
        %v901 = vmax.f32 %v877, %v894
        %v902 = vmax.f32 %v878, %v898
        %v903 = vmax.f32 %v879, %v897
        %v904 = vmax.f32 %v880, %v895
        %v905 = vmax.f32 %v881, %v899
        %906 = vrot.lane.b32.xlu0 %v876, 126
        %v907 = vpop.permute.xlu0 %906
        %908 = vrot.lane.b32.xlu0 %v879, 126
        %v909 = vpop.permute.xlu0 %908
        %910 = vrot.lane.b32.xlu0 %v877, 126
        %v911 = vpop.permute.xlu0 %910
        %912 = vrot.lane.b32.xlu0 %v880, 126
        %v913 = vpop.permute.xlu0 %912
        %914 = vrot.lane.b32.xlu0 %v878, 126
        %v915 = vpop.permute.xlu0 %914
        %916 = vrot.lane.b32.xlu0 %v881, 126
        %v917 = vpop.permute.xlu0 %916
        %vm918 = vcmp.lt.s32.totalorder %v367, 126
        %v919 = vsel %vm918, %v911, %v915
        %v920 = vsel %vm918, %v913, %v917
        %v921 = vsel %vm918, %v907, %v911
        %v922 = vsel %vm918, %v909, %v913
        %v923 = vsel %vm918, %v915, %v907
        %v924 = vsel %vm918, %v917, %v909
        %v925 = vmax.f32 %v900, %v921
        %v926 = vmax.f32 %v901, %v919
        %v927 = vmax.f32 %v902, %v923
        %v928 = vmax.f32 %v903, %v922
        %v929 = vmax.f32 %v904, %v920
        %v930 = vmax.f32 %v905, %v924
        %931 = vrot.lane.b32.xlu0 %v925, 110
        %v932 = vpop.permute.xlu0 %931
        %933 = vrot.lane.b32.xlu0 %v928, 110
        %v934 = vpop.permute.xlu0 %933
        %935 = vrot.lane.b32.xlu0 %v926, 110
        %v936 = vpop.permute.xlu0 %935
        %937 = vrot.lane.b32.xlu0 %v929, 110
        %v938 = vpop.permute.xlu0 %937
        %939 = vrot.lane.b32.xlu0 %v927, 110
        %v940 = vpop.permute.xlu0 %939
        %941 = vrot.lane.b32.xlu0 %v930, 110
        %v942 = vpop.permute.xlu0 %941
        %v943 = vsel %vm538, %v936, %v940
        %v944 = vsel %vm538, %v938, %v942
        %v945 = vsel %vm538, %v932, %v936
        %v946 = vsel %vm538, %v934, %v938
        %v947 = vsel %vm538, %v940, %v932
        %v948 = vsel %vm538, %v942, %v934
        %v949 = vmax.f32 %v925, %v945
        %v950 = vmax.f32 %v926, %v943
        %v951 = vmax.f32 %v927, %v947
        %v952 = vmax.f32 %v928, %v946
        %v953 = vmax.f32 %v929, %v944
        %v954 = vmax.f32 %v930, %v948
        %955 = vrot.lane.b32.xlu0 %v925, 92
        %v956 = vpop.permute.xlu0 %955
        %957 = vrot.lane.b32.xlu0 %v928, 92
        %v958 = vpop.permute.xlu0 %957
        %959 = vrot.lane.b32.xlu0 %v926, 92
        %v960 = vpop.permute.xlu0 %959
        %961 = vrot.lane.b32.xlu0 %v929, 92
        %v962 = vpop.permute.xlu0 %961
        %963 = vrot.lane.b32.xlu0 %v927, 92
        %v964 = vpop.permute.xlu0 %963
        %965 = vrot.lane.b32.xlu0 %v930, 92
        %v966 = vpop.permute.xlu0 %965
        %vm967 = vcmp.lt.s32.totalorder %v367, 92
        %v968 = vsel %vm967, %v960, %v964
        %v969 = vsel %vm967, %v962, %v966
        %v970 = vsel %vm967, %v956, %v960
        %v971 = vsel %vm967, %v958, %v962
        %v972 = vsel %vm967, %v964, %v956
        %v973 = vsel %vm967, %v966, %v958
        %v974 = vmax.f32 %v949, %v970
        %v975 = vmax.f32 %v950, %v968
        %v976 = vmax.f32 %v951, %v972
        %v977 = vmax.f32 %v952, %v971
        %v978 = vmax.f32 %v953, %v969
        %v979 = vmax.f32 %v954, %v973
        %980 = vst [vmem:[#allocation3] sm:$0xff] 0.0
        %981 = vst [vmem:[#allocation3 + $0x8] sm:$0xff] 0.0
        %v982 = vld [vmem:[#allocation7] sm:$0xff]
        %v983 = vld [vmem:[#allocation7 + $0x8] sm:$0xff]
        %v985 = vsel %vm779, %v974, 0
        %v988 = vsel %vm779, %v977, 0
        %990 = vmatpush.msra.mxu0 0.0
        %991 = vmatpush.msra.mxu0 0.0
        %992 = vmatpush.msra.mxu0 0.0
        %993 = vmatpush.msra.mxu0 0.0
        %994 = vmatpush.msra.mxu0 0.0
        %995 = vmatpush.msra.mxu0 0.0
        %996 = vmatpush.msra.mxu0 0.0
        %997 = vmatpush.msra.mxu0 0.0
        %998 = vmatpush.msra.mxu0 0.0
        %999 = vmatpush.msra.mxu0 0.0
        %1000 = vmatpush.msra.mxu0 0.0
        %1001 = vmatpush.msra.mxu0 0.0
        %1002 = vmatpush.msra.mxu0 0.0
        %1003 = vmatpush.msra.mxu0 0.0
        %1004 = vmatpush.msra.mxu0 %v983
        %1005 = vmatpush.msra.mxu0 %v982
        %1006 = vmatmul.f32.gmra.mxu0 %v985
        %v1007 = vpop.f32.mrf.mxu0
        %v1008 = vadd.f32 0.0, %v1007
        %1009 = vmatmul.f32.gmra.mxu0 %v988
        %v1010 = vpop.f32.mrf.mxu0
        %v1011 = vadd.f32 0.0, %v1010
        %1012 = vdwg.mxu0
        %1015 = vrot.lane.b32.xlu0 %v1008, 10
        %v1016 = vpop.permute.xlu0 %1015
        %1017 = vrot.lane.b32.xlu0 %v1011, 10
        %v1018 = vpop.permute.xlu0 %1017
        %vm1021 = vcmask 162896
        %1022 = vst.msk [vmem:[#allocation3] sm:$0xff] %vm1021, %v1016
        %1023 = vst.msk [vmem:[#allocation3 + $0x8] sm:$0xff] %vm1021, %v1018
        %1024 = vrot.lane.b32.xlu0 %v974, 92
        %v1025 = vpop.permute.xlu0 %1024
        %1026 = vrot.lane.b32.xlu0 %v977, 92
        %v1027 = vpop.permute.xlu0 %1026
        %v1028 = vsel %vm779, %v1025, 0
        %v1030 = vsel %vm779, %v1027, 0
        %1032 = vmatpush.msra.mxu0 0.0
        %1033 = vmatpush.msra.mxu0 0.0
        %1034 = vmatpush.msra.mxu0 0.0
        %1035 = vmatpush.msra.mxu0 0.0
        %1036 = vmatpush.msra.mxu0 0.0
        %1037 = vmatpush.msra.mxu0 0.0
        %1038 = vmatpush.msra.mxu0 0.0
        %1039 = vmatpush.msra.mxu0 0.0
        %1040 = vmatpush.msra.mxu0 0.0
        %1041 = vmatpush.msra.mxu0 0.0
        %1042 = vmatpush.msra.mxu0 0.0
        %1043 = vmatpush.msra.mxu0 0.0
        %1044 = vmatpush.msra.mxu0 0.0
        %1045 = vmatpush.msra.mxu0 0.0
        %1046 = vmatpush.msra.mxu0 %v983
        %1047 = vmatpush.msra.mxu0 %v982
        %1048 = vmatmul.f32.gmra.mxu0 %v1028
        %v1049 = vpop.f32.mrf.mxu0
        %v1050 = vadd.f32 0.0, %v1049
        %1051 = vmatmul.f32.gmra.mxu0 %v1030
        %v1052 = vpop.f32.mrf.mxu0
        %v1053 = vadd.f32 0.0, %v1052
        %1054 = vdwg.mxu0
        %1057 = vrot.lane.b32.xlu0 %v1050, 20
        %v1058 = vpop.permute.xlu0 %1057
        %1059 = vrot.lane.b32.xlu0 %v1053, 20
        %v1060 = vpop.permute.xlu0 %1059
        %vm1063 = vcmask 244896
        %1064 = vst.msk [vmem:[#allocation3] sm:$0xff] %vm1063, %v1058
        %1065 = vst.msk [vmem:[#allocation3 + $0x8] sm:$0xff] %vm1063, %v1060
        %1066 = vrot.lane.b32.xlu0 %v974, 56
        %v1067 = vpop.permute.xlu0 %1066
        %1068 = vrot.lane.b32.xlu0 %v977, 56
        %v1069 = vpop.permute.xlu0 %1068
        %v1070 = vsel %vm779, %v1067, 0
        %v1072 = vsel %vm779, %v1069, 0
        %1074 = vmatpush.msra.mxu0 0.0
        %1075 = vmatpush.msra.mxu0 0.0
        %1076 = vmatpush.msra.mxu0 0.0
        %1077 = vmatpush.msra.mxu0 0.0
        %1078 = vmatpush.msra.mxu0 0.0
        %1079 = vmatpush.msra.mxu0 0.0
        %1080 = vmatpush.msra.mxu0 0.0
        %1081 = vmatpush.msra.mxu0 0.0
        %1082 = vmatpush.msra.mxu0 0.0
        %1083 = vmatpush.msra.mxu0 0.0
        %1084 = vmatpush.msra.mxu0 0.0
        %1085 = vmatpush.msra.mxu0 0.0
        %1086 = vmatpush.msra.mxu0 0.0
        %1087 = vmatpush.msra.mxu0 0.0
        %1088 = vmatpush.msra.mxu0 %v983
        %1089 = vmatpush.msra.mxu0 %v982
        %1090 = vmatmul.f32.gmra.mxu0 %v1070
        %v1091 = vpop.f32.mrf.mxu0
        %v1092 = vadd.f32 0.0, %v1091
        %1093 = vmatmul.f32.gmra.mxu0 %v1072
        %v1094 = vpop.f32.mrf.mxu0
        %v1095 = vadd.f32 0.0, %v1094
        %1096 = vdwg.mxu0
        %1099 = vrot.lane.b32.xlu0 %v1092, 30
        %v1100 = vpop.permute.xlu0 %1099
        %1101 = vrot.lane.b32.xlu0 %v1095, 30
        %v1102 = vpop.permute.xlu0 %1101
        %vm1105 = vcmask 326896
        %1106 = vst.msk [vmem:[#allocation3] sm:$0xff] %vm1105, %v1100
        %1107 = vst.msk [vmem:[#allocation3 + $0x8] sm:$0xff] %vm1105, %v1102
        %1108 = vrot.lane.b32.xlu0 %v974, 20
        %v1109 = vpop.permute.xlu0 %1108
        %1110 = vrot.lane.b32.xlu0 %v977, 20
        %v1111 = vpop.permute.xlu0 %1110
        %v1112 = vsel %vm779, %v1109, 0
        %v1114 = vsel %vm779, %v1111, 0
        %1116 = vmatpush.msra.mxu0 0.0
        %1117 = vmatpush.msra.mxu0 0.0
        %1118 = vmatpush.msra.mxu0 0.0
        %1119 = vmatpush.msra.mxu0 0.0
        %1120 = vmatpush.msra.mxu0 0.0
        %1121 = vmatpush.msra.mxu0 0.0
        %1122 = vmatpush.msra.mxu0 0.0
        %1123 = vmatpush.msra.mxu0 0.0
        %1124 = vmatpush.msra.mxu0 0.0
        %1125 = vmatpush.msra.mxu0 0.0
        %1126 = vmatpush.msra.mxu0 0.0
        %1127 = vmatpush.msra.mxu0 0.0
        %1128 = vmatpush.msra.mxu0 0.0
        %1129 = vmatpush.msra.mxu0 0.0
        %1130 = vmatpush.msra.mxu0 %v983
        %1131 = vmatpush.msra.mxu0 %v982
        %1132 = vmatmul.f32.gmra.mxu0 %v1112
        %v1133 = vpop.f32.mrf.mxu0
        %v1134 = vadd.f32 0.0, %v1133
        %1135 = vmatmul.f32.gmra.mxu0 %v1114
        %v1136 = vpop.f32.mrf.mxu0
        %v1137 = vadd.f32 0.0, %v1136
        %1138 = vdwg.mxu0
        %1141 = vrot.lane.b32.xlu0 %v1134, 40
        %v1142 = vpop.permute.xlu0 %1141
        %1143 = vrot.lane.b32.xlu0 %v1137, 40
        %v1144 = vpop.permute.xlu0 %1143
        %vm1147 = vcmask 408896
        %1148 = vst.msk [vmem:[#allocation3] sm:$0xff] %vm1147, %v1142
        %1149 = vst.msk [vmem:[#allocation3 + $0x8] sm:$0xff] %vm1147, %v1144
        %1152 = vrot.lane.b32.xlu0 %v975, 112
        %v1153 = vpop.permute.xlu0 %1152
        %1154 = vrot.lane.b32.xlu0 %v978, 112
        %v1155 = vpop.permute.xlu0 %1154
        %v1156 = vsel %vm779, %v1153, 0
        %v1158 = vsel %vm779, %v1155, 0
        %1160 = vmatpush.msra.mxu0 0.0
        %1161 = vmatpush.msra.mxu0 0.0
        %1162 = vmatpush.msra.mxu0 0.0
        %1163 = vmatpush.msra.mxu0 0.0
        %1164 = vmatpush.msra.mxu0 0.0
        %1165 = vmatpush.msra.mxu0 0.0
        %1166 = vmatpush.msra.mxu0 0.0
        %1167 = vmatpush.msra.mxu0 0.0
        %1168 = vmatpush.msra.mxu0 0.0
        %1169 = vmatpush.msra.mxu0 0.0
        %1170 = vmatpush.msra.mxu0 0.0
        %1171 = vmatpush.msra.mxu0 0.0
        %1172 = vmatpush.msra.mxu0 0.0
        %1173 = vmatpush.msra.mxu0 0.0
        %1174 = vmatpush.msra.mxu0 %v983
        %1175 = vmatpush.msra.mxu0 %v982
        %1176 = vmatmul.f32.gmra.mxu0 %v1156
        %v1177 = vpop.f32.mrf.mxu0
        %v1178 = vadd.f32 0.0, %v1177
        %1179 = vmatmul.f32.gmra.mxu0 %v1158
        %v1180 = vpop.f32.mrf.mxu0
        %v1181 = vadd.f32 0.0, %v1180
        %1182 = vdwg.mxu0
        %1185 = vrot.lane.b32.xlu0 %v1178, 50
        %v1186 = vpop.permute.xlu0 %1185
        %1187 = vrot.lane.b32.xlu0 %v1181, 50
        %v1188 = vpop.permute.xlu0 %1187
        %vm1191 = vcmask 490896
        %1192 = vst.msk [vmem:[#allocation3] sm:$0xff] %vm1191, %v1186
        %1193 = vst.msk [vmem:[#allocation3 + $0x8] sm:$0xff] %vm1191, %v1188
        %1194 = vrot.lane.b32.xlu0 %v975, 76
        %v1195 = vpop.permute.xlu0 %1194
        %1196 = vrot.lane.b32.xlu0 %v978, 76
        %v1197 = vpop.permute.xlu0 %1196
        %v1198 = vsel %vm779, %v1195, 0
        %v1200 = vsel %vm779, %v1197, 0
        %1202 = vmatpush.msra.mxu0 0.0
        %1203 = vmatpush.msra.mxu0 0.0
        %1204 = vmatpush.msra.mxu0 0.0
        %1205 = vmatpush.msra.mxu0 0.0
        %1206 = vmatpush.msra.mxu0 0.0
        %1207 = vmatpush.msra.mxu0 0.0
        %1208 = vmatpush.msra.mxu0 0.0
        %1209 = vmatpush.msra.mxu0 0.0
        %1210 = vmatpush.msra.mxu0 0.0
        %1211 = vmatpush.msra.mxu0 0.0
        %1212 = vmatpush.msra.mxu0 0.0
        %1213 = vmatpush.msra.mxu0 0.0
        %1214 = vmatpush.msra.mxu0 0.0
        %1215 = vmatpush.msra.mxu0 0.0
        %1216 = vmatpush.msra.mxu0 %v983
        %1217 = vmatpush.msra.mxu0 %v982
        %1218 = vmatmul.f32.gmra.mxu0 %v1198
        %v1219 = vpop.f32.mrf.mxu0
        %v1220 = vadd.f32 0.0, %v1219
        %1221 = vmatmul.f32.gmra.mxu0 %v1200
        %v1222 = vpop.f32.mrf.mxu0
        %v1223 = vadd.f32 0.0, %v1222
        %1224 = vdwg.mxu0
        %1227 = vrot.lane.b32.xlu0 %v1220, 60
        %v1228 = vpop.permute.xlu0 %1227
        %1229 = vrot.lane.b32.xlu0 %v1223, 60
        %v1230 = vpop.permute.xlu0 %1229
        %vm1233 = vcmask 572896
        %1234 = vst.msk [vmem:[#allocation3] sm:$0xff] %vm1233, %v1228
        %1235 = vst.msk [vmem:[#allocation3 + $0x8] sm:$0xff] %vm1233, %v1230
        %1236 = vrot.lane.b32.xlu0 %v975, 40
        %v1237 = vpop.permute.xlu0 %1236
        %1238 = vrot.lane.b32.xlu0 %v978, 40
        %v1239 = vpop.permute.xlu0 %1238
        %v1240 = vsel %vm779, %v1237, 0
        %v1242 = vsel %vm779, %v1239, 0
        %1244 = vmatpush.msra.mxu0 0.0
        %1245 = vmatpush.msra.mxu0 0.0
        %1246 = vmatpush.msra.mxu0 0.0
        %1247 = vmatpush.msra.mxu0 0.0
        %1248 = vmatpush.msra.mxu0 0.0
        %1249 = vmatpush.msra.mxu0 0.0
        %1250 = vmatpush.msra.mxu0 0.0
        %1251 = vmatpush.msra.mxu0 0.0
        %1252 = vmatpush.msra.mxu0 0.0
        %1253 = vmatpush.msra.mxu0 0.0
        %1254 = vmatpush.msra.mxu0 0.0
        %1255 = vmatpush.msra.mxu0 0.0
        %1256 = vmatpush.msra.mxu0 0.0
        %1257 = vmatpush.msra.mxu0 0.0
        %1258 = vmatpush.msra.mxu0 %v983
        %1259 = vmatpush.msra.mxu0 %v982
        %1260 = vmatmul.f32.gmra.mxu0 %v1240
        %v1261 = vpop.f32.mrf.mxu0
        %v1262 = vadd.f32 0.0, %v1261
        %1263 = vmatmul.f32.gmra.mxu0 %v1242
        %v1264 = vpop.f32.mrf.mxu0
        %v1265 = vadd.f32 0.0, %v1264
        %1266 = vdwg.mxu0
        %1269 = vrot.lane.b32.xlu0 %v1262, 70
        %v1270 = vpop.permute.xlu0 %1269
        %1271 = vrot.lane.b32.xlu0 %v1265, 70
        %v1272 = vpop.permute.xlu0 %1271
        %vm1275 = vcmask 654896
        %1276 = vst.msk [vmem:[#allocation3] sm:$0xff] %vm1275, %v1270
        %1277 = vst.msk [vmem:[#allocation3 + $0x8] sm:$0xff] %vm1275, %v1272
        %1280 = vrot.lane.b32.xlu0 %v975, 4
        %v1281 = vpop.permute.xlu0 %1280
        %1282 = vrot.lane.b32.xlu0 %v976, 4
        %v1283 = vpop.permute.xlu0 %1282
        %1284 = vrot.lane.b32.xlu0 %v978, 4
        %v1285 = vpop.permute.xlu0 %1284
        %1286 = vrot.lane.b32.xlu0 %v979, 4
        %v1287 = vpop.permute.xlu0 %1286
        %vm1288 = vcmask 31744
        %v1289 = vsel %vm1288, %v1281, %v1283
        %v1290 = vsel %vm1288, %v1285, %v1287
        %v1291 = vsel %vm779, %v1289, 0
        %v1293 = vsel %vm779, %v1290, 0
        %1295 = vmatpush.msra.mxu0 0.0
        %1296 = vmatpush.msra.mxu0 0.0
        %1297 = vmatpush.msra.mxu0 0.0
        %1298 = vmatpush.msra.mxu0 0.0
        %1299 = vmatpush.msra.mxu0 0.0
        %1300 = vmatpush.msra.mxu0 0.0
        %1301 = vmatpush.msra.mxu0 0.0
        %1302 = vmatpush.msra.mxu0 0.0
        %1303 = vmatpush.msra.mxu0 0.0
        %1304 = vmatpush.msra.mxu0 0.0
        %1305 = vmatpush.msra.mxu0 0.0
        %1306 = vmatpush.msra.mxu0 0.0
        %1307 = vmatpush.msra.mxu0 0.0
        %1308 = vmatpush.msra.mxu0 0.0
        %1309 = vmatpush.msra.mxu0 %v983
        %1310 = vmatpush.msra.mxu0 %v982
        %1311 = vmatmul.f32.gmra.mxu0 %v1291
        %v1312 = vpop.f32.mrf.mxu0
        %v1313 = vadd.f32 0.0, %v1312
        %1314 = vmatmul.f32.gmra.mxu0 %v1293
        %v1315 = vpop.f32.mrf.mxu0
        %v1316 = vadd.f32 0.0, %v1315
        %1317 = vdwg.mxu0
        %1320 = vrot.lane.b32.xlu0 %v1313, 80
        %v1321 = vpop.permute.xlu0 %1320
        %1322 = vrot.lane.b32.xlu0 %v1316, 80
        %v1323 = vpop.permute.xlu0 %1322
        %vm1326 = vcmask 736896
        %1327 = vst.msk [vmem:[#allocation3] sm:$0xff] %vm1326, %v1321
        %1328 = vst.msk [vmem:[#allocation3 + $0x8] sm:$0xff] %vm1326, %v1323
        %v1329 = vld [vmem:[#allocation3] sm:$0xff]
        %v1330 = vld [vmem:[#allocation3 + $0x8] sm:$0xff]
        %v1331 = vld [vmem:[%s6] sm:$0x1]
        %v1332 = vmax.f32 %v1329, 0.0
        %v1333 = vmax.f32 %v1330, 0.0
        %v1334 = vld [vmem:[%s3] sm:$0xff]
        %v1335 = vld [vmem:[%s3 + $0x8] sm:$0xff]
        %v1336 = vld [vmem:[%s4] sm:$0xff]
        %v1337 = vld [vmem:[%s4 + $0x8] sm:$0xff]
        %1338 = vrot.lane.b32.xlu0 %v1332, 11
        %v1339 = vpop.permute.xlu0 %1338
        %1340 = vrot.lane.b32.xlu0 %v1333, 11
        %v1341 = vpop.permute.xlu0 %1340
        %v1342 = vpack.c.bf16 %v1339, %v1339
        %v1343 = vpack.c.bf16 %v1341, %v1341
        %1344 = vst [vmem:[#allocation2] sm:$0xf] %v1342
        %1345 = vst [vmem:[#allocation2 + $0xc] sm:$0xf] %v1343
        %1346 = vrot.lane.b32.xlu0 %v1332, 10
        %v1347 = vpop.permute.xlu0 %1346
        %1348 = vrot.lane.b32.xlu0 %v1333, 10
        %v1349 = vpop.permute.xlu0 %1348
        %v1350 = vpack.c.bf16 %v1347, %v1347
        %v1351 = vpack.c.bf16 %v1349, %v1349
        %1352 = vst [vmem:[#allocation2 + $0x18] sm:$0xf] %v1350
        %1353 = vst [vmem:[#allocation2 + $0x24] sm:$0xf] %v1351
        %1354 = vrot.lane.b32.xlu0 %v1332, 9
        %v1355 = vpop.permute.xlu0 %1354
        %1356 = vrot.lane.b32.xlu0 %v1333, 9
        %v1357 = vpop.permute.xlu0 %1356
        %v1358 = vpack.c.bf16 %v1355, %v1355
        %v1359 = vpack.c.bf16 %v1357, %v1357
        %1360 = vst [vmem:[#allocation2 + $0x30] sm:$0xf] %v1358
        %1361 = vst [vmem:[#allocation2 + $0x3c] sm:$0xf] %v1359
        %1362 = vrot.lane.b32.xlu0 %v1332, 1
        %v1363 = vpop.permute.xlu0 %1362
        %1364 = vrot.lane.b32.xlu0 %v1333, 1
        %v1365 = vpop.permute.xlu0 %1364
        %v1366 = vpack.c.bf16 %v1363, %v1363
        %v1367 = vpack.c.bf16 %v1365, %v1365
        %1368 = vst [vmem:[#allocation2 + $0x48] sm:$0xf] %v1366
        %1369 = vst [vmem:[#allocation2 + $0x54] sm:$0xf] %v1367
        %v1370 = vpack.c.bf16 %v1332, %v1332
        %v1371 = vpack.c.bf16 %v1333, %v1333
        %1372 = vst [vmem:[#allocation2 + $0x60] sm:$0xf] %v1370
        %1373 = vst [vmem:[#allocation2 + $0x6c] sm:$0xf] %v1371
        %1374 = vrot.lane.b32.xlu0 %v1332, 127
        %v1375 = vpop.permute.xlu0 %1374
        %1376 = vrot.lane.b32.xlu0 %v1333, 127
        %v1377 = vpop.permute.xlu0 %1376
        %v1378 = vpack.c.bf16 %v1375, %v1375
        %v1379 = vpack.c.bf16 %v1377, %v1377
        %1380 = vst [vmem:[#allocation2 + $0x78] sm:$0xf] %v1378
        %1381 = vst [vmem:[#allocation2 + $0x84] sm:$0xf] %v1379
        %1382 = vrot.lane.b32.xlu0 %v1332, 119
        %v1383 = vpop.permute.xlu0 %1382
        %1384 = vrot.lane.b32.xlu0 %v1333, 119
        %v1385 = vpop.permute.xlu0 %1384
        %v1386 = vpack.c.bf16 %v1383, %v1383
        %v1387 = vpack.c.bf16 %v1385, %v1385
        %1388 = vst [vmem:[#allocation2 + $0x90] sm:$0xf] %v1386
        %1389 = vst [vmem:[#allocation2 + $0x9c] sm:$0xf] %v1387
        %1390 = vrot.lane.b32.xlu0 %v1332, 118
        %v1391 = vpop.permute.xlu0 %1390
        %1392 = vrot.lane.b32.xlu0 %v1333, 118
        %v1393 = vpop.permute.xlu0 %1392
        %v1394 = vpack.c.bf16 %v1391, %v1391
        %v1395 = vpack.c.bf16 %v1393, %v1393
        %1396 = vst [vmem:[#allocation2 + $0xa8] sm:$0xf] %v1394
        %1397 = vst [vmem:[#allocation2 + $0xb4] sm:$0xf] %v1395
        %1398 = vrot.lane.b32.xlu0 %v1332, 117
        %v1399 = vpop.permute.xlu0 %1398
        %1400 = vrot.lane.b32.xlu0 %v1333, 117
        %v1401 = vpop.permute.xlu0 %1400
        %v1402 = vpack.c.bf16 %v1399, %v1399
        %v1403 = vpack.c.bf16 %v1401, %v1401
        %1404 = vst [vmem:[#allocation2 + $0xc0] sm:$0xf] %v1402
        %1405 = vst [vmem:[#allocation2 + $0xcc] sm:$0xf] %v1403
        %v1406 = vld [vmem:[#allocation2] sm:$0xf]
        %v1407 = vld [vmem:[#allocation2 + $0xc] sm:$0xf]
        %v1408 = vld [vmem:[#allocation2 + $0x18] sm:$0xf]
        %v1409 = vld [vmem:[#allocation2 + $0x24] sm:$0xf]
        %v1410 = vld [vmem:[#allocation2 + $0x30] sm:$0xf]
        %v1411 = vld [vmem:[#allocation2 + $0x3c] sm:$0xf]
        %v1412 = vld [vmem:[#allocation2 + $0x48] sm:$0xf]
        %v1413 = vld [vmem:[#allocation2 + $0x54] sm:$0xf]
        %v1414 = vld [vmem:[#allocation2 + $0x60] sm:$0xf]
        %v1415 = vld [vmem:[#allocation2 + $0x6c] sm:$0xf]
        %v1416 = vld [vmem:[#allocation2 + $0x78] sm:$0xf]
        %v1417 = vld [vmem:[#allocation2 + $0x84] sm:$0xf]
        %v1418 = vld [vmem:[#allocation2 + $0x90] sm:$0xf]
        %v1419 = vld [vmem:[#allocation2 + $0x9c] sm:$0xf]
        %v1420 = vld [vmem:[#allocation2 + $0xa8] sm:$0xf]
        %v1421 = vld [vmem:[#allocation2 + $0xb4] sm:$0xf]
        %v1422 = vld [vmem:[#allocation2 + $0xc0] sm:$0xf]
        %v1423 = vld [vmem:[#allocation2 + $0xcc] sm:$0xf]
        %1425 = vset.pattern.permute.xlu0 0
        %1426 = vperm.xlu0 %1425, %v1336
        %v1427 = vpop.permute.xlu0 %1426
        %1430 = vset.pattern.permute.xlu0 0
        %1431 = vperm.xlu0 %1430, %v1337
        %v1432 = vpop.permute.xlu0 %1431
        %v1436 = vunpack.c.l.b16 %v1334
        %v1437 = vunpack.c.h.b16 %v1334
        %v1438 = vunpack.c.l.b16 %v1335
        %v1439 = vunpack.c.h.b16 %v1335
        %v1440 = vpack.c.b16 %v1438, %v1436
        %v1441 = vpack.c.b16 %v1439, %v1437
        %v1461 = vunpack.c.l.b16 %v1406
        %v1462 = vunpack.c.l.b16 %v1407
        %v1463 = vunpack.c.l.b16 %v1408
        %v1464 = vunpack.c.l.b16 %v1409
        %v1465 = vunpack.c.l.b16 %v1410
        %v1466 = vunpack.c.l.b16 %v1411
        %v1467 = vunpack.c.l.b16 %v1412
        %v1468 = vunpack.c.l.b16 %v1413
        %v1469 = vunpack.c.l.b16 %v1414
        %v1470 = vunpack.c.l.b16 %v1415
        %v1471 = vunpack.c.l.b16 %v1416
        %v1472 = vunpack.c.l.b16 %v1417
        %v1473 = vunpack.c.l.b16 %v1418
        %v1474 = vunpack.c.l.b16 %v1419
        %v1475 = vunpack.c.l.b16 %v1420
        %v1476 = vunpack.c.l.b16 %v1421
        %v1477 = vunpack.c.l.b16 %v1422
        %v1478 = vunpack.c.l.b16 %v1423
        %v1479 = vpack.c.b16 %v1462, %v1461
        %v1480 = vpack.c.b16 %v1464, %v1463
        %v1481 = vpack.c.b16 %v1466, %v1465
        %v1482 = vpack.c.b16 %v1468, %v1467
        %v1483 = vpack.c.b16 %v1470, %v1469
        %v1484 = vpack.c.b16 %v1472, %v1471
        %v1485 = vpack.c.b16 %v1474, %v1473
        %v1486 = vpack.c.b16 %v1476, %v1475
        %v1487 = vpack.c.b16 %v1478, %v1477
        %v1498 = vsel %vm779, %v1441, 0
        %1500 = vmatpush.bf16.msra.mxu0 %v1486
        %1501 = vmatpush.bf16.msra.mxu0 %v1485
        %1502 = vmatpush.bf16.msra.mxu0 %v1484
        %1503 = vmatpush.bf16.msra.mxu0 %v1483
        %1504 = vmatpush.bf16.msra.mxu0 %v1482
        %1505 = vmatpush.bf16.msra.mxu0 %v1481
        %1506 = vmatpush.bf16.msra.mxu0 %v1480
        %1507 = vmatpush.bf16.msra.mxu0 %v1479
        %1508 = vmatmul.bf16.gmra.mxu0 %v1440
        %v1509 = vpop.f32.mrf.mxu0
        %v1510 = vadd.f32 %v1427, %v1509
        %v1511 = vpop.f32.mrf.mxu0
        %v1512 = vadd.f32 %v1432, %v1511
        %1513 = vdwg.mxu0
        %1514 = vmatpush.bf16.msra.mxu0 0
        %1515 = vmatpush.bf16.msra.mxu0 0
        %1516 = vmatpush.bf16.msra.mxu0 0
        %1517 = vmatpush.bf16.msra.mxu0 0
        %1518 = vmatpush.bf16.msra.mxu0 0
        %1519 = vmatpush.bf16.msra.mxu0 0
        %1520 = vmatpush.bf16.msra.mxu0 0
        %1521 = vmatpush.bf16.msra.mxu0 %v1487
        %1522 = vmatmul.bf16.gmra.mxu0 %v1498
        %v1523 = vpop.f32.mrf.mxu0
        %v1524 = vadd.f32 %v1510, %v1523
        %v1525 = vpop.f32.mrf.mxu0
        %v1526 = vadd.f32 %v1512, %v1525
        %1527 = vdwg.mxu0
        %v1528 = vmax.f32 %v1524, 0.0
        %v1529 = vmax.f32 %v1526, 0.0
        %v1531 = vperm.slane %v1331, 0
        %v1533 = vmul.f32 %v1528, %v1531
        %v1534 = vmul.f32 %v1529, %v1531
        %s1535 = scalar_lea.vmem %s3, 16
        %v1536 = vld [vmem:[%s1535] sm:$0xff]
        %v1537 = vld [vmem:[%s1535 + $0x8] sm:$0xff]
        %s1538 = scalar_lea.vmem %s4, 16
        %v1539 = vld [vmem:[%s1538] sm:$0xff]
        %v1540 = vld [vmem:[%s1538 + $0x8] sm:$0xff]
        %1541 = vrot.lane.b32.xlu0 %v1533, 11
        %v1542 = vpop.permute.xlu0 %1541
        %1543 = vrot.lane.b32.xlu0 %v1534, 11
        %v1544 = vpop.permute.xlu0 %1543
        %v1545 = vpack.c.bf16 %v1542, %v1542
        %v1546 = vpack.c.bf16 %v1544, %v1544
        %1547 = vst [vmem:[#allocation2] sm:$0xf] %v1545
        %1548 = vst [vmem:[#allocation2 + $0xc] sm:$0xf] %v1546
        %1549 = vrot.lane.b32.xlu0 %v1533, 10
        %v1550 = vpop.permute.xlu0 %1549
        %1551 = vrot.lane.b32.xlu0 %v1534, 10
        %v1552 = vpop.permute.xlu0 %1551
        %v1553 = vpack.c.bf16 %v1550, %v1550
        %v1554 = vpack.c.bf16 %v1552, %v1552
        %1555 = vst [vmem:[#allocation2 + $0x18] sm:$0xf] %v1553
        %1556 = vst [vmem:[#allocation2 + $0x24] sm:$0xf] %v1554
        %1557 = vrot.lane.b32.xlu0 %v1533, 9
        %v1558 = vpop.permute.xlu0 %1557
        %1559 = vrot.lane.b32.xlu0 %v1534, 9
        %v1560 = vpop.permute.xlu0 %1559
        %v1561 = vpack.c.bf16 %v1558, %v1558
        %v1562 = vpack.c.bf16 %v1560, %v1560
        %1563 = vst [vmem:[#allocation2 + $0x30] sm:$0xf] %v1561
        %1564 = vst [vmem:[#allocation2 + $0x3c] sm:$0xf] %v1562
        %1565 = vrot.lane.b32.xlu0 %v1533, 1
        %v1566 = vpop.permute.xlu0 %1565
        %1567 = vrot.lane.b32.xlu0 %v1534, 1
        %v1568 = vpop.permute.xlu0 %1567
        %v1569 = vpack.c.bf16 %v1566, %v1566
        %v1570 = vpack.c.bf16 %v1568, %v1568
        %1571 = vst [vmem:[#allocation2 + $0x48] sm:$0xf] %v1569
        %1572 = vst [vmem:[#allocation2 + $0x54] sm:$0xf] %v1570
        %v1573 = vpack.c.bf16 %v1533, %v1533
        %v1574 = vpack.c.bf16 %v1534, %v1534
        %1575 = vst [vmem:[#allocation2 + $0x60] sm:$0xf] %v1573
        %1576 = vst [vmem:[#allocation2 + $0x6c] sm:$0xf] %v1574
        %1577 = vrot.lane.b32.xlu0 %v1533, 127
        %v1578 = vpop.permute.xlu0 %1577
        %1579 = vrot.lane.b32.xlu0 %v1534, 127
        %v1580 = vpop.permute.xlu0 %1579
        %v1581 = vpack.c.bf16 %v1578, %v1578
        %v1582 = vpack.c.bf16 %v1580, %v1580
        %1583 = vst [vmem:[#allocation2 + $0x78] sm:$0xf] %v1581
        %1584 = vst [vmem:[#allocation2 + $0x84] sm:$0xf] %v1582
        %1585 = vrot.lane.b32.xlu0 %v1533, 119
        %v1586 = vpop.permute.xlu0 %1585
        %1587 = vrot.lane.b32.xlu0 %v1534, 119
        %v1588 = vpop.permute.xlu0 %1587
        %v1589 = vpack.c.bf16 %v1586, %v1586
        %v1590 = vpack.c.bf16 %v1588, %v1588
        %1591 = vst [vmem:[#allocation2 + $0x90] sm:$0xf] %v1589
        %1592 = vst [vmem:[#allocation2 + $0x9c] sm:$0xf] %v1590
        %1593 = vrot.lane.b32.xlu0 %v1533, 118
        %v1594 = vpop.permute.xlu0 %1593
        %1595 = vrot.lane.b32.xlu0 %v1534, 118
        %v1596 = vpop.permute.xlu0 %1595
        %v1597 = vpack.c.bf16 %v1594, %v1594
        %v1598 = vpack.c.bf16 %v1596, %v1596
        %1599 = vst [vmem:[#allocation2 + $0xa8] sm:$0xf] %v1597
        %1600 = vst [vmem:[#allocation2 + $0xb4] sm:$0xf] %v1598
        %1601 = vrot.lane.b32.xlu0 %v1533, 117
        %v1602 = vpop.permute.xlu0 %1601
        %1603 = vrot.lane.b32.xlu0 %v1534, 117
        %v1604 = vpop.permute.xlu0 %1603
        %v1605 = vpack.c.bf16 %v1602, %v1602
        %v1606 = vpack.c.bf16 %v1604, %v1604
        %1607 = vst [vmem:[#allocation2 + $0xc0] sm:$0xf] %v1605
        %1608 = vst [vmem:[#allocation2 + $0xcc] sm:$0xf] %v1606
        %v1609 = vld [vmem:[#allocation2] sm:$0xf]
        %v1610 = vld [vmem:[#allocation2 + $0xc] sm:$0xf]
        %v1611 = vld [vmem:[#allocation2 + $0x18] sm:$0xf]
        %v1612 = vld [vmem:[#allocation2 + $0x24] sm:$0xf]
        %v1613 = vld [vmem:[#allocation2 + $0x30] sm:$0xf]
        %v1614 = vld [vmem:[#allocation2 + $0x3c] sm:$0xf]
        %v1615 = vld [vmem:[#allocation2 + $0x48] sm:$0xf]
        %v1616 = vld [vmem:[#allocation2 + $0x54] sm:$0xf]
        %v1617 = vld [vmem:[#allocation2 + $0x60] sm:$0xf]
        %v1618 = vld [vmem:[#allocation2 + $0x6c] sm:$0xf]
        %v1619 = vld [vmem:[#allocation2 + $0x78] sm:$0xf]
        %v1620 = vld [vmem:[#allocation2 + $0x84] sm:$0xf]
        %v1621 = vld [vmem:[#allocation2 + $0x90] sm:$0xf]
        %v1622 = vld [vmem:[#allocation2 + $0x9c] sm:$0xf]
        %v1623 = vld [vmem:[#allocation2 + $0xa8] sm:$0xf]
        %v1624 = vld [vmem:[#allocation2 + $0xb4] sm:$0xf]
        %v1625 = vld [vmem:[#allocation2 + $0xc0] sm:$0xf]
        %v1626 = vld [vmem:[#allocation2 + $0xcc] sm:$0xf]
        %1628 = vset.pattern.permute.xlu0 0
        %1629 = vperm.xlu0 %1628, %v1539
        %v1630 = vpop.permute.xlu0 %1629
        %1633 = vset.pattern.permute.xlu0 0
        %1634 = vperm.xlu0 %1633, %v1540
        %v1635 = vpop.permute.xlu0 %1634
        %v1639 = vunpack.c.l.b16 %v1536
        %v1640 = vunpack.c.h.b16 %v1536
        %v1641 = vunpack.c.l.b16 %v1537
        %v1642 = vunpack.c.h.b16 %v1537
        %v1643 = vpack.c.b16 %v1641, %v1639
        %v1644 = vpack.c.b16 %v1642, %v1640
        %v1664 = vunpack.c.l.b16 %v1609
        %v1665 = vunpack.c.l.b16 %v1610
        %v1666 = vunpack.c.l.b16 %v1611
        %v1667 = vunpack.c.l.b16 %v1612
        %v1668 = vunpack.c.l.b16 %v1613
        %v1669 = vunpack.c.l.b16 %v1614
        %v1670 = vunpack.c.l.b16 %v1615
        %v1671 = vunpack.c.l.b16 %v1616
        %v1672 = vunpack.c.l.b16 %v1617
        %v1673 = vunpack.c.l.b16 %v1618
        %v1674 = vunpack.c.l.b16 %v1619
        %v1675 = vunpack.c.l.b16 %v1620
        %v1676 = vunpack.c.l.b16 %v1621
        %v1677 = vunpack.c.l.b16 %v1622
        %v1678 = vunpack.c.l.b16 %v1623
        %v1679 = vunpack.c.l.b16 %v1624
        %v1680 = vunpack.c.l.b16 %v1625
        %v1681 = vunpack.c.l.b16 %v1626
        %v1682 = vpack.c.b16 %v1665, %v1664
        %v1683 = vpack.c.b16 %v1667, %v1666
        %v1684 = vpack.c.b16 %v1669, %v1668
        %v1685 = vpack.c.b16 %v1671, %v1670
        %v1686 = vpack.c.b16 %v1673, %v1672
        %v1687 = vpack.c.b16 %v1675, %v1674
        %v1688 = vpack.c.b16 %v1677, %v1676
        %v1689 = vpack.c.b16 %v1679, %v1678
        %v1690 = vpack.c.b16 %v1681, %v1680
        %v1701 = vsel %vm779, %v1644, 0
        %1703 = vmatpush.bf16.msra.mxu0 %v1689
        %1704 = vmatpush.bf16.msra.mxu0 %v1688
        %1705 = vmatpush.bf16.msra.mxu0 %v1687
        %1706 = vmatpush.bf16.msra.mxu0 %v1686
        %1707 = vmatpush.bf16.msra.mxu0 %v1685
        %1708 = vmatpush.bf16.msra.mxu0 %v1684
        %1709 = vmatpush.bf16.msra.mxu0 %v1683
        %1710 = vmatpush.bf16.msra.mxu0 %v1682
        %1711 = vmatmul.bf16.gmra.mxu0 %v1643
        %v1712 = vpop.f32.mrf.mxu0
        %v1713 = vadd.f32 %v1630, %v1712
        %v1714 = vpop.f32.mrf.mxu0
        %v1715 = vadd.f32 %v1635, %v1714
        %1716 = vdwg.mxu0
        %1717 = vmatpush.bf16.msra.mxu0 0
        %1718 = vmatpush.bf16.msra.mxu0 0
        %1719 = vmatpush.bf16.msra.mxu0 0
        %1720 = vmatpush.bf16.msra.mxu0 0
        %1721 = vmatpush.bf16.msra.mxu0 0
        %1722 = vmatpush.bf16.msra.mxu0 0
        %1723 = vmatpush.bf16.msra.mxu0 0
        %1724 = vmatpush.bf16.msra.mxu0 %v1690
        %1725 = vmatmul.bf16.gmra.mxu0 %v1701
        %v1726 = vpop.f32.mrf.mxu0
        %v1727 = vadd.f32 %v1713, %v1726
        %v1728 = vpop.f32.mrf.mxu0
        %v1729 = vadd.f32 %v1715, %v1728
        %1730 = vdwg.mxu0
        %v1731 = vmul.f32 %v1727, %v1531
        %v1732 = vmul.f32 %v1729, %v1531
        %v1733 = vadd.f32 %v1329, %v1731
        %v1734 = vadd.f32 %v1330, %v1732
        %v1735 = vmax.f32 %v1733, 0.0
        %v1736 = vmax.f32 %v1734, 0.0
        %s1737 = scalar_lea.vmem %s3, 32
        %v1738 = vld [vmem:[%s1737] sm:$0xff]
        %v1739 = vld [vmem:[%s1737 + $0x8] sm:$0xff]
        %s1740 = scalar_lea.vmem %s4, 32
        %v1741 = vld [vmem:[%s1740] sm:$0xff]
        %v1742 = vld [vmem:[%s1740 + $0x8] sm:$0xff]
        %1743 = vrot.lane.b32.xlu0 %v1735, 11
        %v1744 = vpop.permute.xlu0 %1743
        %1745 = vrot.lane.b32.xlu0 %v1736, 11
        %v1746 = vpop.permute.xlu0 %1745
        %v1747 = vpack.c.bf16 %v1744, %v1744
        %v1748 = vpack.c.bf16 %v1746, %v1746
        %1749 = vst [vmem:[#allocation2] sm:$0xf] %v1747
        %1750 = vst [vmem:[#allocation2 + $0xc] sm:$0xf] %v1748
        %1751 = vrot.lane.b32.xlu0 %v1735, 10
        %v1752 = vpop.permute.xlu0 %1751
        %1753 = vrot.lane.b32.xlu0 %v1736, 10
        %v1754 = vpop.permute.xlu0 %1753
        %v1755 = vpack.c.bf16 %v1752, %v1752
        %v1756 = vpack.c.bf16 %v1754, %v1754
        %1757 = vst [vmem:[#allocation2 + $0x18] sm:$0xf] %v1755
        %1758 = vst [vmem:[#allocation2 + $0x24] sm:$0xf] %v1756
        %1759 = vrot.lane.b32.xlu0 %v1735, 9
        %v1760 = vpop.permute.xlu0 %1759
        %1761 = vrot.lane.b32.xlu0 %v1736, 9
        %v1762 = vpop.permute.xlu0 %1761
        %v1763 = vpack.c.bf16 %v1760, %v1760
        %v1764 = vpack.c.bf16 %v1762, %v1762
        %1765 = vst [vmem:[#allocation2 + $0x30] sm:$0xf] %v1763
        %1766 = vst [vmem:[#allocation2 + $0x3c] sm:$0xf] %v1764
        %1767 = vrot.lane.b32.xlu0 %v1735, 1
        %v1768 = vpop.permute.xlu0 %1767
        %1769 = vrot.lane.b32.xlu0 %v1736, 1
        %v1770 = vpop.permute.xlu0 %1769
        %v1771 = vpack.c.bf16 %v1768, %v1768
        %v1772 = vpack.c.bf16 %v1770, %v1770
        %1773 = vst [vmem:[#allocation2 + $0x48] sm:$0xf] %v1771
        %1774 = vst [vmem:[#allocation2 + $0x54] sm:$0xf] %v1772
        %v1775 = vpack.c.bf16 %v1735, %v1735
        %v1776 = vpack.c.bf16 %v1736, %v1736
        %1777 = vst [vmem:[#allocation2 + $0x60] sm:$0xf] %v1775
        %1778 = vst [vmem:[#allocation2 + $0x6c] sm:$0xf] %v1776
        %1779 = vrot.lane.b32.xlu0 %v1735, 127
        %v1780 = vpop.permute.xlu0 %1779
        %1781 = vrot.lane.b32.xlu0 %v1736, 127
        %v1782 = vpop.permute.xlu0 %1781
        %v1783 = vpack.c.bf16 %v1780, %v1780
        %v1784 = vpack.c.bf16 %v1782, %v1782
        %1785 = vst [vmem:[#allocation2 + $0x78] sm:$0xf] %v1783
        %1786 = vst [vmem:[#allocation2 + $0x84] sm:$0xf] %v1784
        %1787 = vrot.lane.b32.xlu0 %v1735, 119
        %v1788 = vpop.permute.xlu0 %1787
        %1789 = vrot.lane.b32.xlu0 %v1736, 119
        %v1790 = vpop.permute.xlu0 %1789
        %v1791 = vpack.c.bf16 %v1788, %v1788
        %v1792 = vpack.c.bf16 %v1790, %v1790
        %1793 = vst [vmem:[#allocation2 + $0x90] sm:$0xf] %v1791
        %1794 = vst [vmem:[#allocation2 + $0x9c] sm:$0xf] %v1792
        %1795 = vrot.lane.b32.xlu0 %v1735, 118
        %v1796 = vpop.permute.xlu0 %1795
        %1797 = vrot.lane.b32.xlu0 %v1736, 118
        %v1798 = vpop.permute.xlu0 %1797
        %v1799 = vpack.c.bf16 %v1796, %v1796
        %v1800 = vpack.c.bf16 %v1798, %v1798
        %1801 = vst [vmem:[#allocation2 + $0xa8] sm:$0xf] %v1799
        %1802 = vst [vmem:[#allocation2 + $0xb4] sm:$0xf] %v1800
        %1803 = vrot.lane.b32.xlu0 %v1735, 117
        %v1804 = vpop.permute.xlu0 %1803
        %1805 = vrot.lane.b32.xlu0 %v1736, 117
        %v1806 = vpop.permute.xlu0 %1805
        %v1807 = vpack.c.bf16 %v1804, %v1804
        %v1808 = vpack.c.bf16 %v1806, %v1806
        %1809 = vst [vmem:[#allocation2 + $0xc0] sm:$0xf] %v1807
        %1810 = vst [vmem:[#allocation2 + $0xcc] sm:$0xf] %v1808
        %v1811 = vld [vmem:[#allocation2] sm:$0xf]
        %v1812 = vld [vmem:[#allocation2 + $0xc] sm:$0xf]
        %v1813 = vld [vmem:[#allocation2 + $0x18] sm:$0xf]
        %v1814 = vld [vmem:[#allocation2 + $0x24] sm:$0xf]
        %v1815 = vld [vmem:[#allocation2 + $0x30] sm:$0xf]
        %v1816 = vld [vmem:[#allocation2 + $0x3c] sm:$0xf]
        %v1817 = vld [vmem:[#allocation2 + $0x48] sm:$0xf]
        %v1818 = vld [vmem:[#allocation2 + $0x54] sm:$0xf]
        %v1819 = vld [vmem:[#allocation2 + $0x60] sm:$0xf]
        %v1820 = vld [vmem:[#allocation2 + $0x6c] sm:$0xf]
        %v1821 = vld [vmem:[#allocation2 + $0x78] sm:$0xf]
        %v1822 = vld [vmem:[#allocation2 + $0x84] sm:$0xf]
        %v1823 = vld [vmem:[#allocation2 + $0x90] sm:$0xf]
        %v1824 = vld [vmem:[#allocation2 + $0x9c] sm:$0xf]
        %v1825 = vld [vmem:[#allocation2 + $0xa8] sm:$0xf]
        %v1826 = vld [vmem:[#allocation2 + $0xb4] sm:$0xf]
        %v1827 = vld [vmem:[#allocation2 + $0xc0] sm:$0xf]
        %v1828 = vld [vmem:[#allocation2 + $0xcc] sm:$0xf]
        %1830 = vset.pattern.permute.xlu0 0
        %1831 = vperm.xlu0 %1830, %v1741
        %v1832 = vpop.permute.xlu0 %1831
        %1835 = vset.pattern.permute.xlu0 0
        %1836 = vperm.xlu0 %1835, %v1742
        %v1837 = vpop.permute.xlu0 %1836
        %v1841 = vunpack.c.l.b16 %v1738
        %v1842 = vunpack.c.h.b16 %v1738
        %v1843 = vunpack.c.l.b16 %v1739
        %v1844 = vunpack.c.h.b16 %v1739
        %v1845 = vpack.c.b16 %v1843, %v1841
        %v1846 = vpack.c.b16 %v1844, %v1842
        %v1866 = vunpack.c.l.b16 %v1811
        %v1867 = vunpack.c.l.b16 %v1812
        %v1868 = vunpack.c.l.b16 %v1813
        %v1869 = vunpack.c.l.b16 %v1814
        %v1870 = vunpack.c.l.b16 %v1815
        %v1871 = vunpack.c.l.b16 %v1816
        %v1872 = vunpack.c.l.b16 %v1817
        %v1873 = vunpack.c.l.b16 %v1818
        %v1874 = vunpack.c.l.b16 %v1819
        %v1875 = vunpack.c.l.b16 %v1820
        %v1876 = vunpack.c.l.b16 %v1821
        %v1877 = vunpack.c.l.b16 %v1822
        %v1878 = vunpack.c.l.b16 %v1823
        %v1879 = vunpack.c.l.b16 %v1824
        %v1880 = vunpack.c.l.b16 %v1825
        %v1881 = vunpack.c.l.b16 %v1826
        %v1882 = vunpack.c.l.b16 %v1827
        %v1883 = vunpack.c.l.b16 %v1828
        %v1884 = vpack.c.b16 %v1867, %v1866
        %v1885 = vpack.c.b16 %v1869, %v1868
        %v1886 = vpack.c.b16 %v1871, %v1870
        %v1887 = vpack.c.b16 %v1873, %v1872
        %v1888 = vpack.c.b16 %v1875, %v1874
        %v1889 = vpack.c.b16 %v1877, %v1876
        %v1890 = vpack.c.b16 %v1879, %v1878
        %v1891 = vpack.c.b16 %v1881, %v1880
        %v1892 = vpack.c.b16 %v1883, %v1882
        %v1903 = vsel %vm779, %v1846, 0
        %1905 = vmatpush.bf16.msra.mxu0 %v1891
        %1906 = vmatpush.bf16.msra.mxu0 %v1890
        %1907 = vmatpush.bf16.msra.mxu0 %v1889
        %1908 = vmatpush.bf16.msra.mxu0 %v1888
        %1909 = vmatpush.bf16.msra.mxu0 %v1887
        %1910 = vmatpush.bf16.msra.mxu0 %v1886
        %1911 = vmatpush.bf16.msra.mxu0 %v1885
        %1912 = vmatpush.bf16.msra.mxu0 %v1884
        %1913 = vmatmul.bf16.gmra.mxu0 %v1845
        %v1914 = vpop.f32.mrf.mxu0
        %v1915 = vadd.f32 %v1832, %v1914
        %v1916 = vpop.f32.mrf.mxu0
        %v1917 = vadd.f32 %v1837, %v1916
        %1918 = vdwg.mxu0
        %1919 = vmatpush.bf16.msra.mxu0 0
        %1920 = vmatpush.bf16.msra.mxu0 0
        %1921 = vmatpush.bf16.msra.mxu0 0
        %1922 = vmatpush.bf16.msra.mxu0 0
        %1923 = vmatpush.bf16.msra.mxu0 0
        %1924 = vmatpush.bf16.msra.mxu0 0
        %1925 = vmatpush.bf16.msra.mxu0 0
        %1926 = vmatpush.bf16.msra.mxu0 %v1892
        %1927 = vmatmul.bf16.gmra.mxu0 %v1903
        %v1928 = vpop.f32.mrf.mxu0
        %v1929 = vadd.f32 %v1915, %v1928
        %v1930 = vpop.f32.mrf.mxu0
        %v1931 = vadd.f32 %v1917, %v1930
        %1932 = vdwg.mxu0
        %v1933 = vmax.f32 %v1929, 0.0
        %v1934 = vmax.f32 %v1931, 0.0
        %v1935 = vmul.f32 %v1933, %v1531
        %v1936 = vmul.f32 %v1934, %v1531
        %s1937 = scalar_lea.vmem %s3, 48
        %v1938 = vld [vmem:[%s1937] sm:$0xff]
        %v1939 = vld [vmem:[%s1937 + $0x8] sm:$0xff]
        %s1940 = scalar_lea.vmem %s4, 48
        %v1941 = vld [vmem:[%s1940] sm:$0xff]
        %v1942 = vld [vmem:[%s1940 + $0x8] sm:$0xff]
        %1943 = vrot.lane.b32.xlu0 %v1935, 11
        %v1944 = vpop.permute.xlu0 %1943
        %1945 = vrot.lane.b32.xlu0 %v1936, 11
        %v1946 = vpop.permute.xlu0 %1945
        %v1947 = vpack.c.bf16 %v1944, %v1944
        %v1948 = vpack.c.bf16 %v1946, %v1946
        %1949 = vst [vmem:[#allocation2] sm:$0xf] %v1947
        %1950 = vst [vmem:[#allocation2 + $0xc] sm:$0xf] %v1948
        %1951 = vrot.lane.b32.xlu0 %v1935, 10
        %v1952 = vpop.permute.xlu0 %1951
        %1953 = vrot.lane.b32.xlu0 %v1936, 10
        %v1954 = vpop.permute.xlu0 %1953
        %v1955 = vpack.c.bf16 %v1952, %v1952
        %v1956 = vpack.c.bf16 %v1954, %v1954
        %1957 = vst [vmem:[#allocation2 + $0x18] sm:$0xf] %v1955
        %1958 = vst [vmem:[#allocation2 + $0x24] sm:$0xf] %v1956
        %1959 = vrot.lane.b32.xlu0 %v1935, 9
        %v1960 = vpop.permute.xlu0 %1959
        %1961 = vrot.lane.b32.xlu0 %v1936, 9
        %v1962 = vpop.permute.xlu0 %1961
        %v1963 = vpack.c.bf16 %v1960, %v1960
        %v1964 = vpack.c.bf16 %v1962, %v1962
        %1965 = vst [vmem:[#allocation2 + $0x30] sm:$0xf] %v1963
        %1966 = vst [vmem:[#allocation2 + $0x3c] sm:$0xf] %v1964
        %1967 = vrot.lane.b32.xlu0 %v1935, 1
        %v1968 = vpop.permute.xlu0 %1967
        %1969 = vrot.lane.b32.xlu0 %v1936, 1
        %v1970 = vpop.permute.xlu0 %1969
        %v1971 = vpack.c.bf16 %v1968, %v1968
        %v1972 = vpack.c.bf16 %v1970, %v1970
        %1973 = vst [vmem:[#allocation2 + $0x48] sm:$0xf] %v1971
        %1974 = vst [vmem:[#allocation2 + $0x54] sm:$0xf] %v1972
        %v1975 = vpack.c.bf16 %v1935, %v1935
        %v1976 = vpack.c.bf16 %v1936, %v1936
        %1977 = vst [vmem:[#allocation2 + $0x60] sm:$0xf] %v1975
        %1978 = vst [vmem:[#allocation2 + $0x6c] sm:$0xf] %v1976
        %1979 = vrot.lane.b32.xlu0 %v1935, 127
        %v1980 = vpop.permute.xlu0 %1979
        %1981 = vrot.lane.b32.xlu0 %v1936, 127
        %v1982 = vpop.permute.xlu0 %1981
        %v1983 = vpack.c.bf16 %v1980, %v1980
        %v1984 = vpack.c.bf16 %v1982, %v1982
        %1985 = vst [vmem:[#allocation2 + $0x78] sm:$0xf] %v1983
        %1986 = vst [vmem:[#allocation2 + $0x84] sm:$0xf] %v1984
        %1987 = vrot.lane.b32.xlu0 %v1935, 119
        %v1988 = vpop.permute.xlu0 %1987
        %1989 = vrot.lane.b32.xlu0 %v1936, 119
        %v1990 = vpop.permute.xlu0 %1989
        %v1991 = vpack.c.bf16 %v1988, %v1988
        %v1992 = vpack.c.bf16 %v1990, %v1990
        %1993 = vst [vmem:[#allocation2 + $0x90] sm:$0xf] %v1991
        %1994 = vst [vmem:[#allocation2 + $0x9c] sm:$0xf] %v1992
        %1995 = vrot.lane.b32.xlu0 %v1935, 118
        %v1996 = vpop.permute.xlu0 %1995
        %1997 = vrot.lane.b32.xlu0 %v1936, 118
        %v1998 = vpop.permute.xlu0 %1997
        %v1999 = vpack.c.bf16 %v1996, %v1996
        %v2000 = vpack.c.bf16 %v1998, %v1998
        %2001 = vst [vmem:[#allocation2 + $0xa8] sm:$0xf] %v1999
        %2002 = vst [vmem:[#allocation2 + $0xb4] sm:$0xf] %v2000
        %2003 = vrot.lane.b32.xlu0 %v1935, 117
        %v2004 = vpop.permute.xlu0 %2003
        %2005 = vrot.lane.b32.xlu0 %v1936, 117
        %v2006 = vpop.permute.xlu0 %2005
        %v2007 = vpack.c.bf16 %v2004, %v2004
        %v2008 = vpack.c.bf16 %v2006, %v2006
        %2009 = vst [vmem:[#allocation2 + $0xc0] sm:$0xf] %v2007
        %2010 = vst [vmem:[#allocation2 + $0xcc] sm:$0xf] %v2008
        %v2011 = vld [vmem:[#allocation2] sm:$0xf]
        %v2012 = vld [vmem:[#allocation2 + $0xc] sm:$0xf]
        %v2013 = vld [vmem:[#allocation2 + $0x18] sm:$0xf]
        %v2014 = vld [vmem:[#allocation2 + $0x24] sm:$0xf]
        %v2015 = vld [vmem:[#allocation2 + $0x30] sm:$0xf]
        %v2016 = vld [vmem:[#allocation2 + $0x3c] sm:$0xf]
        %v2017 = vld [vmem:[#allocation2 + $0x48] sm:$0xf]
        %v2018 = vld [vmem:[#allocation2 + $0x54] sm:$0xf]
        %v2019 = vld [vmem:[#allocation2 + $0x60] sm:$0xf]
        %v2020 = vld [vmem:[#allocation2 + $0x6c] sm:$0xf]
        %v2021 = vld [vmem:[#allocation2 + $0x78] sm:$0xf]
        %v2022 = vld [vmem:[#allocation2 + $0x84] sm:$0xf]
        %v2023 = vld [vmem:[#allocation2 + $0x90] sm:$0xf]
        %v2024 = vld [vmem:[#allocation2 + $0x9c] sm:$0xf]
        %v2025 = vld [vmem:[#allocation2 + $0xa8] sm:$0xf]
        %v2026 = vld [vmem:[#allocation2 + $0xb4] sm:$0xf]
        %v2027 = vld [vmem:[#allocation2 + $0xc0] sm:$0xf]
        %v2028 = vld [vmem:[#allocation2 + $0xcc] sm:$0xf]
        %2030 = vset.pattern.permute.xlu0 0
        %2031 = vperm.xlu0 %2030, %v1941
        %v2032 = vpop.permute.xlu0 %2031
        %2035 = vset.pattern.permute.xlu0 0
        %2036 = vperm.xlu0 %2035, %v1942
        %v2037 = vpop.permute.xlu0 %2036
        %v2041 = vunpack.c.l.b16 %v1938
        %v2042 = vunpack.c.h.b16 %v1938
        %v2043 = vunpack.c.l.b16 %v1939
        %v2044 = vunpack.c.h.b16 %v1939
        %v2045 = vpack.c.b16 %v2043, %v2041
        %v2046 = vpack.c.b16 %v2044, %v2042
        %v2066 = vunpack.c.l.b16 %v2011
        %v2067 = vunpack.c.l.b16 %v2012
        %v2068 = vunpack.c.l.b16 %v2013
        %v2069 = vunpack.c.l.b16 %v2014
        %v2070 = vunpack.c.l.b16 %v2015
        %v2071 = vunpack.c.l.b16 %v2016
        %v2072 = vunpack.c.l.b16 %v2017
        %v2073 = vunpack.c.l.b16 %v2018
        %v2074 = vunpack.c.l.b16 %v2019
        %v2075 = vunpack.c.l.b16 %v2020
        %v2076 = vunpack.c.l.b16 %v2021
        %v2077 = vunpack.c.l.b16 %v2022
        %v2078 = vunpack.c.l.b16 %v2023
        %v2079 = vunpack.c.l.b16 %v2024
        %v2080 = vunpack.c.l.b16 %v2025
        %v2081 = vunpack.c.l.b16 %v2026
        %v2082 = vunpack.c.l.b16 %v2027
        %v2083 = vunpack.c.l.b16 %v2028
        %v2084 = vpack.c.b16 %v2067, %v2066
        %v2085 = vpack.c.b16 %v2069, %v2068
        %v2086 = vpack.c.b16 %v2071, %v2070
        %v2087 = vpack.c.b16 %v2073, %v2072
        %v2088 = vpack.c.b16 %v2075, %v2074
        %v2089 = vpack.c.b16 %v2077, %v2076
        %v2090 = vpack.c.b16 %v2079, %v2078
        %v2091 = vpack.c.b16 %v2081, %v2080
        %v2092 = vpack.c.b16 %v2083, %v2082
        %v2103 = vsel %vm779, %v2046, 0
        %2105 = vmatpush.bf16.msra.mxu0 %v2091
        %2106 = vmatpush.bf16.msra.mxu0 %v2090
        %2107 = vmatpush.bf16.msra.mxu0 %v2089
        %2108 = vmatpush.bf16.msra.mxu0 %v2088
        %2109 = vmatpush.bf16.msra.mxu0 %v2087
        %2110 = vmatpush.bf16.msra.mxu0 %v2086
        %2111 = vmatpush.bf16.msra.mxu0 %v2085
        %2112 = vmatpush.bf16.msra.mxu0 %v2084
        %2113 = vmatmul.bf16.gmra.mxu0 %v2045
        %v2114 = vpop.f32.mrf.mxu0
        %v2115 = vadd.f32 %v2032, %v2114
        %v2116 = vpop.f32.mrf.mxu0
        %v2117 = vadd.f32 %v2037, %v2116
        %2118 = vdwg.mxu0
        %2119 = vmatpush.bf16.msra.mxu0 0
        %2120 = vmatpush.bf16.msra.mxu0 0
        %2121 = vmatpush.bf16.msra.mxu0 0
        %2122 = vmatpush.bf16.msra.mxu0 0
        %2123 = vmatpush.bf16.msra.mxu0 0
        %2124 = vmatpush.bf16.msra.mxu0 0
        %2125 = vmatpush.bf16.msra.mxu0 0
        %2126 = vmatpush.bf16.msra.mxu0 %v2092
        %2127 = vmatmul.bf16.gmra.mxu0 %v2103
        %v2128 = vpop.f32.mrf.mxu0
        %v2129 = vadd.f32 %v2115, %v2128
        %v2130 = vpop.f32.mrf.mxu0
        %v2131 = vadd.f32 %v2117, %v2130
        %2132 = vdwg.mxu0
        %v2133 = vmul.f32 %v2129, %v1531
        %v2134 = vmul.f32 %v2131, %v1531
        %v2135 = vadd.f32 %v1733, %v2133
        %v2136 = vadd.f32 %v1734, %v2134
        %2137 = vst [vmem:[%s342] sm:$0xff] %v2135
        %2138 = vst [vmem:[%s342 + $0x8] sm:$0xff] %v2136
        %s2139 = sand.u32 %s207, 1
        %s2140 = scalar_lea.sflag [#allocation6], %s2139
        %s2141 = sand.u32 %s207, 1
        %s2142 = smul.addr %s2141, 16
        %s2143 = scalar_lea.vmem [#allocation9], %s2142
        // Predicated region
        $region61: #{tpu_custom_call.1} parent=51 // pred_check
          %p2144 = pneg %p217
        $region62: #{tpu_custom_call.1} parent=51 // pred_check_branch
          %2146 = sbr.rel (%p2144) target = $region64
        $region63: #{tpu_custom_call.1} parent=51 // pred_region
          %2148 = vsyncadd %s2140, 0
          %s2149 = smul.addr %s26, 2
          %s2150 = smul.addr %s2149, 8
          %s2151 = scalar_lea.hbm %s8, %s2150
          %s2152 = sshll.u32 %s2143, 4
          %s2153 = int_to_ptr.vmem [resolvable:$true] %s2152
          %s2154 = sshll.u32 %s2151, 4
          %s2155 = int_to_ptr.hbm [resolvable:$true] %s2154
          %2160 = dma.vmem_to_hbm [thread:$0]  %s2153, 256, %s2155, %s2140, 128, 128, 8
        $region64: #{tpu_custom_call.1} parent=51 // pred_fallthru
          _
      $region52: #{tpu_custom_call.1} parent=5 // pred_fallthru
        _
      %p2161 = scmp.le.s32.totalorder 2, %s21
      // Predicated region
      $region65: #{tpu_custom_call.1} parent=5 // pred_check
        %p2162 = pneg %p2161
      $region66: #{tpu_custom_call.1} parent=5 // pred_check_branch
        %2164 = sbr.rel (%p2162) target = $region68
      $region67: #{tpu_custom_call.1} parent=5 // pred_region
        %s2165 = ssub.s32 %s21, 2
        // Predicated region
        $region69: #{tpu_custom_call.1} parent=67 // pred_check
          %p2166 = pneg %p223
        $region70: #{tpu_custom_call.1} parent=67 // pred_check_branch
          %2168 = sbr.rel (%p2166) target = $region72
        $region71: #{tpu_custom_call.1} parent=67 // pred_region
          %s2169 = sand.u32 %s208, 1
          %s2170 = scalar_lea.sflag [#allocation6], %s2169
          %s2171 = sand.u32 %s208, 1
          %s2172 = smul.addr %s2171, 16
          %s2173 = scalar_lea.vmem [#allocation9], %s2172
          %2175 = dma.done %s2170, 256
        $region72: #{tpu_custom_call.1} parent=67 // pred_fallthru
          _
      $region68: #{tpu_custom_call.1} parent=5 // pred_fallthru
        _
    $region6: #{tpu_custom_call.1} parent=1 // loop_footer
      %s25 = sadd.s32 1, %s21
    $region7: #{tpu_custom_call.1} parent=1 // loop_footer_branch
      %20 = sbr.rel target = $region3
    $region8: #{tpu_custom_call.1} parent=1 // loop_exit
      _
    %2176 = vsyncpa [#allocation5], 1
    %s2177 = scalar_lea.sflag [#allocation5], 1
    %2178 = vsyncpa %s2177, 1
    %2179 = vsyncpa [#allocation8], 1
    %2180 = vsyncpa [#allocation6], 1
    %s2181 = scalar_lea.sflag [#allocation6], 1
    %2182 = vsyncpa %s2181, 1

</llo_original>
